<compile_context>
chip_gen: v7x
topology: tpu7x:2x2x1
jax: 0.10.0
libtpu: 0.0.40
codegen_flags: <defaults>
</compile_context>

<pallas_src>
import jax
import jax.numpy as jnp
import numpy as np
from jax import lax
from jax.experimental import pallas as pl
from jax.experimental.pallas import tpu as pltpu

BN_EPS = 1e-5


# --------------------------------------------------------------------------- #
# Pallas kernel
# --------------------------------------------------------------------------- #
def llskm_d_kernel(xp_ref, wf_ref, o_ref):
    # xp_ref: (1, H_pad+4, W+4, C)  bf16 padded image, resident across h axis
    # wf_ref: (1, 9*C, C)           bf16 per-n fused weight (theta folded in)
    # o_ref : (1, tile_h, W, C)
    tile_h = o_ref.shape[1]
    W = o_ref.shape[2]

    h = pl.program_id(1)
    row0 = h * tile_h
    if tile_h % 8 == 0:
        row0 = pl.multiple_of(row0, 8)

    # Three width-shifted views (col offsets 0 / 2 / 4) over tile_h+4 rows: the
    # misaligned-sublane slice work happens 3x instead of 9x; the per-tap row
    # offsets below are cheap leading-dim slices of these views.
    views = [xp_ref[0, pl.ds(row0, tile_h + 4), 2 * kw:2 * kw + W, :]
             for kw in range(3)]

    # Block order must match the fused weight layout: center tap first (its
    # weight rows carry w_sum - w_center + theta*w_center), then the 8
    # off-center taps in row-major (kh, kw) order.
    blocks = [views[1][2:2 + tile_h]]
    for kh in range(3):
        for kw in range(3):
            if kh == 1 and kw == 1:
                continue
            blocks.append(views[kw][2 * kh:2 * kh + tile_h])
    slab = jnp.concatenate(blocks, axis=-1)                  # (tile_h, W, 9C) bf16

    # Single MXU contraction == out_center - out_normal + theta * out_offset.
    o_ref[0] = jnp.einsum('hwc,cd->hwd', slab, wf_ref[0],
                          preferred_element_type=jnp.float32).astype(o_ref.dtype)


# --------------------------------------------------------------------------- #
# Host-side preparation
# --------------------------------------------------------------------------- #
def _compute_theta_nhwc(x_nhwc, params):
    """Channel attention (GAP -> 1x1 -> BN -> ReLU -> 1x1 -> BN -> sigmoid),
    eval-mode BN with running stats 0/1 folded in.  Tiny -> plain XLA."""
    hi = lax.Precision.HIGHEST
    mean = jnp.mean(x_nhwc.astype(jnp.float32), axis=(1, 2))           # (N, C)
    y1 = jnp.einsum('nc,jc->nj', mean, params['attn_w1'], precision=hi)
    y1 = params['bn1_g'] * y1 / jnp.sqrt(1.0 + BN_EPS) + params['bn1_b']
    y1 = jnp.maximum(y1, 0.0)
    y2 = jnp.einsum('nj,oj->no', y1, params['attn_w2'], precision=hi)
    y2 = params['bn2_g'] * y2 / jnp.sqrt(1.0 + BN_EPS) + params['bn2_b']
    return jax.nn.sigmoid(y2)                                          # (N, C)


def _prepare_fused_weight(conv_w, theta, compute_dtype):
    """Per-batch fused weight (9C, C):
       block 0 (applied to un-shifted x): w_sum - w_center + theta_n * w_center
       blocks 1..8 (shifted views):       -w_k  for the 8 off-center taps."""
    C = conv_w.shape[0]
    w_taps = jnp.transpose(conv_w.astype(jnp.float32),
                           (2, 3, 1, 0)).reshape(9, C, C)              # (tap, Cin, Cout)
    w_center = w_taps[4]
    w_sum = jnp.sum(w_taps, axis=0)
    blk0 = (w_sum - w_center)[None] + theta[:, None, :] * w_center[None]   # (N, C, C)
    rest = jnp.concatenate([-w_taps[k] for k in range(9) if k != 4], axis=0)  # (8C, C)
    rest = jnp.broadcast_to(rest[None], (theta.shape[0],) + rest.shape)
    return jnp.concatenate([blk0, rest], axis=1).astype(compute_dtype)  # (N, 9C, C)


def _vmem_capacity_bytes():
    try:
        cap = getattr(pltpu.get_tpu_info(), 'vmem_capacity_bytes', None)
        if cap:
            return int(cap)
    except Exception:
        pass
    return 64 * 1024 * 1024        # conservative default (v7x per-core VMEM)


def _pick_tile_h(H, W, C, out_bytes, budget_bytes):
    """Largest row-tile whose VMEM working set fits the budget.  Accounts for
    the resident padded image (x2 pipeline buffers), the per-n fused weight
    (x2), bf16 slab + pre-shifted views, f32 accumulator and x2 output block."""
    fixed = 2 * (H + 16) * (W + 4) * C * 2 + 2 * 9 * C * C * 2
    per_row = W * C * (9 * 2 + 5 * 2 + 4 + 2 * out_bytes)
    avail = max(budget_bytes - fixed, per_row)
    tile = max(1, min(H, avail // per_row))
    if tile >= 8:
        tile = (tile // 8) * 8                      # sublane-friendly rows, big MXU M
    min_rows = min(H, max(1, -(-256 // W)))         # target M = tile*W >= 256
    if tile < min_rows and min_rows * per_row <= avail:
        tile = min_rows
    return int(tile)


# --------------------------------------------------------------------------- #
# Forward wrappers
# --------------------------------------------------------------------------- #
def llskm_d_forward_nhwc(x_nhwc, params, *, compute_dtype=jnp.bfloat16,
                         out_dtype=jnp.float32):
    """x_nhwc: (N, H, W, C) float32.  Returns (N, H, W, C) out_dtype.
    Use out_dtype=bfloat16 on v5e to halve the output HBM writeback."""
    N, H, W, C = x_nhwc.shape
    out_bytes = jnp.dtype(out_dtype).itemsize

    theta = _compute_theta_nhwc(x_nhwc, params)                         # (N, C) f32
    w_fused = _prepare_fused_weight(params['conv_w'], theta, compute_dtype)

    cap = _vmem_capacity_bytes()
    vmem_limit = int(min(cap * 3 // 5, 64 * 1024 * 1024))
    tile_h = _pick_tile_h(H, W, C, out_bytes, vmem_limit * 3 // 4)
    n_tiles = -(-H // tile_h)
    H_pad = n_tiles * tile_h

    x_q = x_nhwc.astype(compute_dtype)
    x_pad = jnp.pad(x_q, ((0, 0), (2, 2 + H_pad - H), (2, 2), (0, 0)))  # halo pad = 2

    grid = (N, n_tiles)
    flops = 2 * N * H_pad * W * C * (9 * C)
    bytes_accessed = (x_pad.size * x_pad.dtype.itemsize
                      + w_fused.size * w_fused.dtype.itemsize
                      + N * H_pad * W * C * out_bytes)
    cost = pl.CostEstimate(flops=int(flops), transcendentals=0,
                           bytes_accessed=int(bytes_accessed))

    out = pl.pallas_call(
        llskm_d_kernel,
        out_shape=jax.ShapeDtypeStruct((N, H_pad, W, C), out_dtype),
        grid_spec=pltpu.PrefetchScalarGridSpec(
            num_scalar_prefetch=0,
            grid=grid,
            in_specs=[
                # padded image: constant block index across h -> resident, no re-DMA
                pl.BlockSpec((1, H_pad + 4, W + 4, C), lambda n, h: (n, 0, 0, 0)),
                # per-n fused weight (theta folded in), resident across h
                pl.BlockSpec((1, 9 * C, C), lambda n, h: (n, 0, 0)),
            ],
            out_specs=pl.BlockSpec((1, tile_h, W, C), lambda n, h: (n, h, 0, 0)),
        ),
        compiler_params=pltpu.CompilerParams(
            dimension_semantics=("parallel", "parallel"),
            vmem_limit_bytes=vmem_limit),
        cost_estimate=cost,
    )(x_pad, w_fused)

    if H_pad != H:
        out = out[:, :H]
    return out


def llskm_d_forward(x_nchw, params, *, compute_dtype=jnp.bfloat16,
                    out_dtype=jnp.float32):
    """Drop-in NCHW interface matching the PyTorch module."""
    x_nhwc = jnp.transpose(x_nchw, (0, 2, 3, 1))
    out = llskm_d_forward_nhwc(x_nhwc, params, compute_dtype=compute_dtype,
                               out_dtype=out_dtype)
    return jnp.transpose(out, (0, 3, 1, 2))                             # NHWC -> NCHW


# --------------------------------------------------------------------------- #
# References for validation
# --------------------------------------------------------------------------- #
def llskm_d_reference_matched(x_nchw, params, compute_dtype=jnp.bfloat16):
    """Pure-JAX reference using the SAME bf16 quantization of x and of the fused
    (theta-folded) weight as the kernel; remaining diffs are f32 sum order."""
    N, C, H, W = x_nchw.shape
    hi = lax.Precision.HIGHEST
    x_nhwc = jnp.transpose(x_nchw, (0, 2, 3, 1))
    theta = _compute_theta_nhwc(x_nhwc, params)
    wf = _prepare_fused_weight(params['conv_w'], theta, compute_dtype).astype(jnp.float32)
    xq = x_nhwc.astype(compute_dtype).astype(jnp.float32)
    xp = jnp.pad(xq, ((0, 0), (2, 2), (2, 2), (0, 0)))
    blocks = [xq]                                                    # center tap block
    for kh in range(3):
        for kw in range(3):
            if kh == 1 and kw == 1:
                continue
            blocks.append(xp[:, 2 * kh:2 * kh + H, 2 * kw:2 * kw + W, :])
    slab = jnp.concatenate(blocks, axis=-1)                          # (N, H, W, 9C)
    out = jnp.einsum('nhwc,ncd->nhwd', slab, wf, precision=hi)
    return jnp.transpose(out, (0, 3, 1, 2))


def llskm_d_reference_f32(x_nchw, params):
    """Exact f32 port of the PyTorch module math (lax conv), eval-mode BN."""
    hi = lax.Precision.HIGHEST
    weight = params['conv_w']
    x_nhwc = jnp.transpose(x_nchw, (0, 2, 3, 1))
    w_hwio = jnp.transpose(weight, (2, 3, 1, 0))
    out_normal = lax.conv_general_dilated(
        x_nhwc, w_hwio, window_strides=(1, 1), padding=((2, 2), (2, 2)),
        rhs_dilation=(2, 2), dimension_numbers=('NHWC', 'HWIO', 'NHWC'),
        precision=hi)
    ksum = jnp.sum(weight, axis=(2, 3))                              # (Cout, Cin)
    out_center = jnp.einsum('nhwc,oc->nhwo', x_nhwc, ksum, precision=hi)
    kcen = weight[:, :, 1, 1]
    out_offset = jnp.einsum('nhwc,oc->nhwo', x_nhwc, kcen, precision=hi)
    theta = _compute_theta_nhwc(x_nhwc, params)
    out = out_center - out_normal + theta[:, None, None, :] * out_offset
    return jnp.transpose(out, (0, 3, 1, 2))


def init_params(key, C, r=4):
    Cr = C // r
    ks = jax.random.split(key, 6)
    return {
        'conv_w': 0.2 * jax.random.normal(ks[0], (C, C, 3, 3), jnp.float32),
        'attn_w1': 0.3 * jax.random.normal(ks[1], (Cr, C), jnp.float32),
        'attn_w2': 0.3 * jax.random.normal(ks[2], (C, Cr), jnp.float32),
        'bn1_g': 1.0 + 0.1 * jax.random.normal(ks[3], (Cr,), jnp.float32),
        'bn1_b': 0.1 * jax.random.normal(ks[4], (Cr,), jnp.float32),
        'bn2_g': 1.0 + 0.1 * jax.random.normal(ks[5], (C,), jnp.float32),
        'bn2_b': jnp.zeros((C,), jnp.float32),
    }


if __name__ == "__main__":
    key = jax.random.PRNGKey(0)
    kx, kp = jax.random.split(key)

    # C lane-aligned (128) so every concat block / matmul operand / output store
    # is a full 128-lane slab; spatial dims kept small for the self-test.
    N, C, H, W = 2, 128, 16, 16
    x = jax.random.normal(kx, (N, C, H, W), jnp.float32)
    params = init_params(kp, C)

    out = jax.block_until_ready(llskm_d_forward(x, params))

    # Tight check: same bf16 quantization (x and theta-folded weight) on both
    # sides -> only f32 accumulation-order noise remains.
    ref_q = jax.block_until_ready(llskm_d_reference_matched(x, params))
    np.testing.assert_allclose(np.asarray(out), np.asarray(ref_q),
                               rtol=2e-3, atol=2e-3)

    # Loose check vs the exact f32 PyTorch-equivalent math: tolerance sized to the
    # bf16 input/weight quantization error over a ~9*C-term contraction.
    ref_f = jax.block_until_ready(llskm_d_reference_f32(x, params))
    scale = float(jnp.std(ref_f))
    np.testing.assert_allclose(np.asarray(out), np.asarray(ref_f),
                               rtol=2e-2, atol=3e-2 * scale)

    print("KERNEL_OK")
</pallas_src>

<mosaic_0001>
module attributes {stable_mosaic.version = 11 : i64} {
  func.func @llskm_d_kernel(%arg0: i32, %arg1: i32, %arg2: memref<1x20x20x128xbf16, #tpu.memory_space<vmem>>, %arg3: memref<1x1152x128xbf16, #tpu.memory_space<vmem>>, %arg4: memref<1x16x16x128xf32, #tpu.memory_space<vmem>>) attributes {dimension_semantics = [#tpu.dimension_semantics<parallel>, #tpu.dimension_semantics<parallel>], iteration_bounds = array<i64: 2, 1>, scalar_prefetch = 0 : i64, scratch_operands = 0 : i64, tpu.core_type = #tpu.core_type<tc>, window_params = [{transform_indices = @transform_0, window_bounds = array<i64: 1, 20, 20, 128>}, {transform_indices = @transform_1, window_bounds = array<i64: 1, 1152, 128>}, {transform_indices = @transform_2, window_bounds = array<i64: 1, 16, 16, 128>}]} {
    %c16_i32 = arith.constant 16 : i32
    %0 = arith.muli %arg1, %c16_i32 : i32
    %1 = tpu.assume_multiple %0, 8 : i32
    %c0 = arith.constant 0 : index
    %2 = arith.index_cast %1 : i32 to index
    %c0_0 = arith.constant 0 : index
    %c0_1 = arith.constant 0 : index
    %3 = vector.load %arg2[%c0, %2, %c0_0, %c0_1] : memref<1x20x20x128xbf16, #tpu.memory_space<vmem>>, vector<1x20x16x128xbf16>
    %4 = vector.shape_cast %3 : vector<1x20x16x128xbf16> to vector<20x16x128xbf16>
    %c0_2 = arith.constant 0 : index
    %5 = arith.index_cast %1 : i32 to index
    %c2 = arith.constant 2 : index
    %c0_3 = arith.constant 0 : index
    %6 = vector.load %arg2[%c0_2, %5, %c2, %c0_3] : memref<1x20x20x128xbf16, #tpu.memory_space<vmem>>, vector<1x20x16x128xbf16>
    %7 = vector.shape_cast %6 : vector<1x20x16x128xbf16> to vector<20x16x128xbf16>
    %c0_4 = arith.constant 0 : index
    %8 = arith.index_cast %1 : i32 to index
    %c4 = arith.constant 4 : index
    %c0_5 = arith.constant 0 : index
    %9 = vector.load %arg2[%c0_4, %8, %c4, %c0_5] : memref<1x20x20x128xbf16, #tpu.memory_space<vmem>>, vector<1x20x16x128xbf16>
    %10 = vector.shape_cast %9 : vector<1x20x16x128xbf16> to vector<20x16x128xbf16>
    %11 = vector.extract_strided_slice %7 {offsets = [2, 0, 0], sizes = [16, 16, 128], strides = [1, 1, 1]} : vector<20x16x128xbf16> to vector<16x16x128xbf16>
    %12 = vector.extract_strided_slice %4 {offsets = [0, 0, 0], sizes = [16, 16, 128], strides = [1, 1, 1]} : vector<20x16x128xbf16> to vector<16x16x128xbf16>
    %13 = vector.extract_strided_slice %7 {offsets = [0, 0, 0], sizes = [16, 16, 128], strides = [1, 1, 1]} : vector<20x16x128xbf16> to vector<16x16x128xbf16>
    %14 = vector.extract_strided_slice %10 {offsets = [0, 0, 0], sizes = [16, 16, 128], strides = [1, 1, 1]} : vector<20x16x128xbf16> to vector<16x16x128xbf16>
    %15 = vector.extract_strided_slice %4 {offsets = [2, 0, 0], sizes = [16, 16, 128], strides = [1, 1, 1]} : vector<20x16x128xbf16> to vector<16x16x128xbf16>
    %16 = vector.extract_strided_slice %10 {offsets = [2, 0, 0], sizes = [16, 16, 128], strides = [1, 1, 1]} : vector<20x16x128xbf16> to vector<16x16x128xbf16>
    %17 = vector.extract_strided_slice %4 {offsets = [4, 0, 0], sizes = [16, 16, 128], strides = [1, 1, 1]} : vector<20x16x128xbf16> to vector<16x16x128xbf16>
    %18 = vector.extract_strided_slice %7 {offsets = [4, 0, 0], sizes = [16, 16, 128], strides = [1, 1, 1]} : vector<20x16x128xbf16> to vector<16x16x128xbf16>
    %19 = vector.extract_strided_slice %10 {offsets = [4, 0, 0], sizes = [16, 16, 128], strides = [1, 1, 1]} : vector<20x16x128xbf16> to vector<16x16x128xbf16>
    %20 = tpu.concatenate %11, %12, %13, %14, %15, %16, %17, %18, %19 in 2 : vector<16x16x128xbf16>, vector<16x16x128xbf16>, vector<16x16x128xbf16>, vector<16x16x128xbf16>, vector<16x16x128xbf16>, vector<16x16x128xbf16>, vector<16x16x128xbf16>, vector<16x16x128xbf16>, vector<16x16x128xbf16> -> vector<16x16x1152xbf16>
    %c0_6 = arith.constant 0 : index
    %c0_7 = arith.constant 0 : index
    %c0_8 = arith.constant 0 : index
    %21 = vector.load %arg3[%c0_6, %c0_7, %c0_8] : memref<1x1152x128xbf16, #tpu.memory_space<vmem>>, vector<1x1152x128xbf16>
    %22 = vector.shape_cast %21 : vector<1x1152x128xbf16> to vector<1152x128xbf16>
    "tpu.trace_start"() <{level = 10 : i32, message = "hwc,cd->hwd"}> : () -> ()
    %cst = arith.constant dense<0.000000e+00> : vector<16x16x128xf32>
    %23 = tpu.matmul %20, %22, %cst {dimension_numbers = #tpu.dot_dimension_numbers<[2], [0], [0, 1], [1], [0, 0, 0, 1, 1, 1], [], []>} : vector<16x16x1152xbf16>, vector<1152x128xbf16>, vector<16x16x128xf32> -> vector<16x16x128xf32>
    "tpu.trace_stop"() : () -> ()
    %c0_9 = arith.constant 0 : index
    %c0_10 = arith.constant 0 : index
    %c0_11 = arith.constant 0 : index
    %c0_12 = arith.constant 0 : index
    %24 = vector.load %arg4[%c0_9, %c0_10, %c0_11, %c0_12] : memref<1x16x16x128xf32, #tpu.memory_space<vmem>>, vector<1x16x16x128xf32>
    %25 = vector.shape_cast %24 : vector<1x16x16x128xf32> to vector<16x16x128xf32>
    %26 = vector.shape_cast %23 : vector<16x16x128xf32> to vector<1x16x16x128xf32>
    tpu.vector_store %arg4[%c0_9, %c0_10, %c0_11, %c0_12], %26 {strides = array<i32>} : memref<1x16x16x128xf32, #tpu.memory_space<vmem>>, vector<1x16x16x128xf32>,
    return
  }
  func.func @transform_0(%arg0: i32, %arg1: i32) -> (i32, i32, i32, i32) {
    %c0_i32 = arith.constant 0 : i32
    %c0_i32_0 = arith.constant 0 : i32
    %c0_i32_1 = arith.constant 0 : i32
    %c0_i32_2 = arith.constant 0 : i32
    return %arg0, %c0_i32, %c0_i32_0, %c0_i32_1 : i32, i32, i32, i32
  }
  func.func @transform_1(%arg0: i32, %arg1: i32) -> (i32, i32, i32) {
    %c0_i32 = arith.constant 0 : i32
    %c0_i32_0 = arith.constant 0 : i32
    %c0_i32_1 = arith.constant 0 : i32
    return %arg0, %c0_i32, %c0_i32_0 : i32, i32, i32
  }
  func.func @transform_2(%arg0: i32, %arg1: i32) -> (i32, i32, i32, i32) {
    %c0_i32 = arith.constant 0 : i32
    %c0_i32_0 = arith.constant 0 : i32
    %c0_i32_1 = arith.constant 0 : i32
    return %arg0, %arg1, %c0_i32, %c0_i32_0 : i32, i32, i32, i32
  }
}

</mosaic_0001>

<llo_original>
// kernel: tpu_custom_call.1
$region0: #{tpu_custom_call.1}
  #allocation0 [shape = 'u32[]', space=smem, size = 0x4, offset = 0x4, fixed_abs, tag = 'smem constant byte address 0x4 - core index']
  #allocation1 [shape = 'u32[144,128]{1,0:T(1,128)}', space=vmem, size = 0x12000, scoped, tag = 'internal scratch']
  %s0 = inlined_call_operand.vmem [shape: bf16[2,20,20,128], index: 0, kind: input, shape index: {}]
  %s1 = inlined_call_operand.hbm [shape: bf16[2,1152,128], index: 1, kind: input, shape index: {}]
  %s2 = inlined_call_operand.hbm [shape: f32[2,16,16,128], index: 2, kind: output, shape index: {}]
  %s3 = sld [smem:[#allocation0]]
  $region45: #{tpu_custom_call.1} parent=0
    _
  %s5 = ssub.s32 1, %s3
  %s6 = scalar_select 0, %s5, %s3
  $region1: #{tpu_custom_call.1} parent=0
    #allocation2 [shape = 'u8[589824]{0}', space=vmem, size = 0x90000, scoped, tag = 'input window, operand 1']
    #allocation3 [shape = 's32[2]{0}', space=sflag, size = 0x8, scoped, tag = 'scoped memory for tpu_custom_call.1']
    #allocation4 [shape = 's32[2]{0}', space=sflag, size = 0x8, scoped, tag = 'scoped memory for tpu_custom_call.1']
    #allocation5 [shape = 'u8[262144]{0}', space=vmem, size = 0x40000, scoped, tag = 'output window, operand 0']
    %7 = vsyncpa [#allocation3], 0
    %s8 = scalar_lea.sflag [#allocation3], 1
    %9 = vsyncpa %s8, 0
    %10 = vsyncpa [#allocation4], 0
    %s11 = scalar_lea.sflag [#allocation4], 1
    %12 = vsyncpa %s11, 0
    loop: start=0, step=1, limit=4
    $region2: #{tpu_custom_call.1} parent=1 // loop_pre_header
      _
    $region3: #{tpu_custom_call.1} parent=1 // loop_header
      %s14 = sphi 0, %s18
      %p15 = scmp.ge.s32.totalorder %s14, 4
      %s21 = sphi 0, %s33
      %s22 = sphi 0, %s29
      %s23 = sphi 0, %s21
      %s24 = sphi 0, %s22
      %s25 = sphi 0, %s23
      %s26 = sphi 0, %s24
      %s36 = sphi 0, %s38
      %s39 = sphi 0, %s36
      %s40 = sphi 0, %s39
      %s56 = sphi 0, %s40
      %s62 = sphi 0, %s64
      %s65 = sphi 0, %s62
      %s66 = sphi 0, %s65
      %s82 = sphi 0, %s66
      %s90 = sphi 0, %s92
      %s93 = sphi 0, %s90
      %s94 = sphi 0, %s93
      %s110 = sphi 0, %s94
    $region4: #{tpu_custom_call.1} parent=1 // loop_header_branch
      %17 = sbr.rel (%p15) target = $region8
    $region5: #{tpu_custom_call.1} parent=1 // loop_body
      %s19 = ssub.s32 %s14, 1
      %s20 = ssub.s32 %s14, 2
      %s27 = sadd.s32 1, %s22
      %p28 = scmp.ge.s32.totalorder %s27, 1
      %s29 = scalar_select %p28, 0, %s27
      %s30 = sadd.s32 1, %s21
      %s31 = scalar_select %p28, %s30, %s21
      %p32 = scmp.ge.s32.totalorder %s31, 2
      %s33 = scalar_select %p32, 0, %s31
      %s34 = ssub.s32 %s21, %s33
      %p35 = scmp.eq.s32.totalorder %s34, 0
      %s37 = sadd.s32 %s36, 1
      %s38 = scalar_select %p35, %s36, %s37
      %p41 = pneg %p35
      %p42 = scmp.eq.s32.totalorder %s14, 1
      %p43 = por %p41, %p42
      %p44 = scmp.ne.s32.totalorder %s36, %s39
      %p45 = scmp.eq.s32.totalorder %s14, 0
      %p46 = por %p44, %p45
      %p47 = scmp.ne.s32.totalorder %s36, %s39
      %p48 = scmp.eq.s32.totalorder %s19, 1
      %p49 = por %p47, %p48
      %p50 = scmp.ne.s32.totalorder %s39, %s40
      %p51 = scmp.eq.s32.totalorder %s19, 0
      %p52 = por %p50, %p51
      %p53 = scmp.ne.s32.totalorder %s39, %s40
      %p54 = scmp.eq.s32.totalorder %s20, 1
      %p55 = por %p53, %p54
      %p57 = scmp.ne.s32.totalorder %s40, %s56
      %p58 = scmp.eq.s32.totalorder %s20, 0
      %p59 = por %p57, %p58
      %s60 = ssub.s32 %s21, %s33
      %p61 = scmp.eq.s32.totalorder %s60, 0
      %s63 = sadd.s32 %s62, 1
      %s64 = scalar_select %p61, %s62, %s63
      %p67 = pneg %p61
      %p68 = scmp.eq.s32.totalorder %s14, 1
      %p69 = por %p67, %p68
      %p70 = scmp.ne.s32.totalorder %s62, %s65
      %p71 = scmp.eq.s32.totalorder %s14, 0
      %p72 = por %p70, %p71
      %p73 = scmp.ne.s32.totalorder %s62, %s65
      %p74 = scmp.eq.s32.totalorder %s19, 1
      %p75 = por %p73, %p74
      %p76 = scmp.ne.s32.totalorder %s65, %s66
      %p77 = scmp.eq.s32.totalorder %s19, 0
      %p78 = por %p76, %p77
      %p79 = scmp.ne.s32.totalorder %s65, %s66
      %p80 = scmp.eq.s32.totalorder %s20, 1
      %p81 = por %p79, %p80
      %p83 = scmp.ne.s32.totalorder %s66, %s82
      %p84 = scmp.eq.s32.totalorder %s20, 0
      %p85 = por %p83, %p84
      %s86 = ssub.s32 %s21, %s33
      %s87 = ssub.s32 %s22, %s29
      %s88 = sor.u32 %s86, %s87
      %p89 = scmp.eq.s32.totalorder %s88, 0
      %s91 = sadd.s32 %s90, 1
      %s92 = scalar_select %p89, %s90, %s91
      %p95 = pneg %p89
      %p96 = scmp.eq.s32.totalorder %s14, 1
      %p97 = por %p95, %p96
      %p98 = scmp.ne.s32.totalorder %s90, %s93
      %p99 = scmp.eq.s32.totalorder %s14, 0
      %p100 = por %p98, %p99
      %p101 = scmp.ne.s32.totalorder %s90, %s93
      %p102 = scmp.eq.s32.totalorder %s19, 1
      %p103 = por %p101, %p102
      %p104 = scmp.ne.s32.totalorder %s93, %s94
      %p105 = scmp.eq.s32.totalorder %s19, 0
      %p106 = por %p104, %p105
      %p107 = scmp.ne.s32.totalorder %s93, %s94
      %p108 = scmp.eq.s32.totalorder %s20, 1
      %p109 = por %p107, %p108
      %p111 = scmp.ne.s32.totalorder %s94, %s110
      %p112 = scmp.eq.s32.totalorder %s20, 0
      %p113 = por %p111, %p112
      %p114 = scmp.le.s32.totalorder 1, %s14
      %p115 = scmp.lt.s32.totalorder %s14, 3
      %p116 = pnand %p114, %p115
      %p117 = pneg %p116
      // Predicated region
      $region9: #{tpu_custom_call.1} parent=5 // pred_check
        _
      $region10: #{tpu_custom_call.1} parent=5 // pred_check_branch
        %119 = sbr.rel (%p116) target = $region12
      $region11: #{tpu_custom_call.1} parent=5 // pred_region
        %s120 = ssub.s32 %s14, 1
      $region12: #{tpu_custom_call.1} parent=5 // pred_fallthru
        _
      %p121 = scmp.lt.s32.totalorder %s14, 2
      // Predicated region
      $region13: #{tpu_custom_call.1} parent=5 // pred_check
        %p122 = pneg %p121
      $region14: #{tpu_custom_call.1} parent=5 // pred_check_branch
        %124 = sbr.rel (%p122) target = $region16
      $region15: #{tpu_custom_call.1} parent=5 // pred_region
        // Predicated region
        $region17: #{tpu_custom_call.1} parent=15 // pred_check
          %p125 = pneg %p46
        $region18: #{tpu_custom_call.1} parent=15 // pred_check_branch
          %127 = sbr.rel (%p125) target = $region20
        $region19: #{tpu_custom_call.1} parent=15 // pred_region
          %p128 = scmp.lt.s32.totalorder %s21, 1
          %s129 = scalar_select %p128, %s21, 1
          %s130 = smul.addr %s129, 60
          %s131 = smul.addr %s130, 4
          %s132 = scalar_lea.vmem %s0, %s131
        $region20: #{tpu_custom_call.1} parent=15 // pred_fallthru
          _
        // Predicated region
        $region21: #{tpu_custom_call.1} parent=15 // pred_check
          %p133 = pneg %p72
        $region22: #{tpu_custom_call.1} parent=15 // pred_check_branch
          %135 = sbr.rel (%p133) target = $region24
        $region23: #{tpu_custom_call.1} parent=15 // pred_region
          %s136 = sand.u32 %s62, 1
          %s137 = scalar_lea.sflag [#allocation3], %s136
          %s138 = sand.u32 %s62, 1
          %s139 = smul.addr %s138, 576
          %s140 = scalar_lea.vmem [#allocation2], %s139
          %s142 = ssub.s32 9216, 9216
          %143 = vsyncadd %s137, %s142
          %s144 = smul.addr %s21, 144
          %s145 = smul.addr %s144, 64
          %s146 = scalar_lea.hbm %s1, %s145
          %s147 = sshll.u32 %s140, 4
          %s148 = int_to_ptr.vmem [resolvable:$true] %s147
          %153 = dma.hbm_to_vmem [thread:$0]  %s146, 9216, %s148, %s137, 64, 64, 4
        $region24: #{tpu_custom_call.1} parent=15 // pred_fallthru
          _
      $region16: #{tpu_custom_call.1} parent=5 // pred_fallthru
        _
      %p154 = scmp.le.s32.totalorder 1, %s14
      %p155 = scmp.lt.s32.totalorder %s14, 3
      %p156 = pnand %p154, %p155
      %p157 = pneg %p156
      // Predicated region
      $region25: #{tpu_custom_call.1} parent=5 // pred_check
        _
      $region26: #{tpu_custom_call.1} parent=5 // pred_check_branch
        %159 = sbr.rel (%p156) target = $region28
      $region27: #{tpu_custom_call.1} parent=5 // pred_region
        %s160 = ssub.s32 %s14, 1
        %s161 = sand.u32 %s65, 1
        %s162 = scalar_lea.sflag [#allocation3], %s161
        %s163 = sand.u32 %s65, 1
        %s164 = smul.addr %s163, 576
        %s165 = scalar_lea.vmem [#allocation2], %s164
        // Predicated region
        $region29: #{tpu_custom_call.1} parent=27 // pred_check
          %p166 = pneg %p78
        $region30: #{tpu_custom_call.1} parent=27 // pred_check_branch
          %168 = sbr.rel (%p166) target = $region32
        $region31: #{tpu_custom_call.1} parent=27 // pred_region
          %169 = dma.done %s162, 9216
        $region32: #{tpu_custom_call.1} parent=27 // pred_fallthru
          _
        %p170 = scmp.lt.s32.totalorder %s23, 1
        %s171 = scalar_select %p170, %s23, 1
        %s172 = smul.addr %s171, 60
        %s173 = smul.addr %s172, 4
        %s174 = scalar_lea.vmem %s0, %s173
        %p175 = pneg %p52
        %p176 = pneg %p49
        %s177 = sand.u32 %s65, 1
        %s178 = scalar_lea.sflag [#allocation3], %s177
        %s179 = sand.u32 %s65, 1
        %s180 = smul.addr %s179, 576
        %s181 = scalar_lea.vmem [#allocation2], %s180
        %p182 = pneg %p78
        %p183 = pneg %p75
        %p184 = pneg %p106
        %p185 = pneg %p103
        %s186 = sand.u32 %s93, 1
        %s187 = scalar_lea.sflag [#allocation4], %s186
        %s188 = sand.u32 %s93, 1
        %s189 = smul.addr %s188, 256
        %s190 = scalar_lea.vmem [#allocation5], %s189
        %p191 = scmp.lt.s32.totalorder %s23, 1
        %s192 = scalar_select %p191, %s23, 1
        %s193 = smul.addr %s192, 60
        %s194 = smul.addr %s193, 4
        %s195 = scalar_lea.vmem %s0, %s194
        %s196 = smul.u32 16, %s24
        %s198 = smul.u32 %s24, 16
        %s199 = smul.u32 %s198, 3
        %s200 = smul.addr %s199, 4
        %s201 = scalar_lea.vmem %s195, %s200
        %v202 = vld [vmem:[%s201] sm:$0xf]
        %v203 = vld [vmem:[%s201 + $0x4] sm:$0xf]
        %v204 = vld [vmem:[%s201 + $0xc] sm:$0xf]
        %v205 = vld [vmem:[%s201 + $0x10] sm:$0xf]
        %v206 = vld [vmem:[%s201 + $0x18] sm:$0xf]
        %v207 = vld [vmem:[%s201 + $0x1c] sm:$0xf]
        %v208 = vld [vmem:[%s201 + $0x24] sm:$0xf]
        %v209 = vld [vmem:[%s201 + $0x28] sm:$0xf]
        %v210 = vld [vmem:[%s201 + $0x30] sm:$0xf]
        %v211 = vld [vmem:[%s201 + $0x34] sm:$0xf]
        %v212 = vld [vmem:[%s201 + $0x3c] sm:$0xf]
        %v213 = vld [vmem:[%s201 + $0x40] sm:$0xf]
        %v214 = vld [vmem:[%s201 + $0x48] sm:$0xf]
        %v215 = vld [vmem:[%s201 + $0x4c] sm:$0xf]
        %v216 = vld [vmem:[%s201 + $0x54] sm:$0xf]
        %v217 = vld [vmem:[%s201 + $0x58] sm:$0xf]
        %v218 = vld [vmem:[%s201 + $0x60] sm:$0xf]
        %v219 = vld [vmem:[%s201 + $0x64] sm:$0xf]
        %v220 = vld [vmem:[%s201 + $0x6c] sm:$0xf]
        %v221 = vld [vmem:[%s201 + $0x70] sm:$0xf]
        %v222 = vld [vmem:[%s201 + $0x78] sm:$0xf]
        %v223 = vld [vmem:[%s201 + $0x7c] sm:$0xf]
        %v224 = vld [vmem:[%s201 + $0x84] sm:$0xf]
        %v225 = vld [vmem:[%s201 + $0x88] sm:$0xf]
        %v226 = vld [vmem:[%s201 + $0x90] sm:$0xf]
        %v227 = vld [vmem:[%s201 + $0x94] sm:$0xf]
        %v228 = vld [vmem:[%s201 + $0x9c] sm:$0xf]
        %v229 = vld [vmem:[%s201 + $0xa0] sm:$0xf]
        %v230 = vld [vmem:[%s201 + $0xa8] sm:$0xf]
        %v231 = vld [vmem:[%s201 + $0xac] sm:$0xf]
        %v232 = vld [vmem:[%s201 + $0xb4] sm:$0xf]
        %v233 = vld [vmem:[%s201 + $0xb8] sm:$0xf]
        %v234 = vld [vmem:[%s201 + $0xc0] sm:$0xf]
        %v235 = vld [vmem:[%s201 + $0xc4] sm:$0xf]
        %v236 = vld [vmem:[%s201 + $0xcc] sm:$0xf]
        %v237 = vld [vmem:[%s201 + $0xd0] sm:$0xf]
        %v238 = vld [vmem:[%s201 + $0xd8] sm:$0xf]
        %v239 = vld [vmem:[%s201 + $0xdc] sm:$0xf]
        %v240 = vld [vmem:[%s201 + $0xe4] sm:$0xf]
        %v241 = vld [vmem:[%s201 + $0xe8] sm:$0xf]
        %v242 = vld [vmem:[%s201] sm:$0xe]
        %v243 = vld [vmem:[%s201 + $0x8] sm:$0x1]
        %v244 = vld [vmem:[%s201 + $0xc] sm:$0xe]
        %v245 = vld [vmem:[%s201 + $0x14] sm:$0x1]
        %v246 = vld [vmem:[%s201 + $0x18] sm:$0xe]
        %v247 = vld [vmem:[%s201 + $0x20] sm:$0x1]
        %v248 = vld [vmem:[%s201 + $0x24] sm:$0xe]
        %v249 = vld [vmem:[%s201 + $0x2c] sm:$0x1]
        %v250 = vld [vmem:[%s201 + $0x30] sm:$0xe]
        %v251 = vld [vmem:[%s201 + $0x38] sm:$0x1]
        %v252 = vld [vmem:[%s201 + $0x3c] sm:$0xe]
        %v253 = vld [vmem:[%s201 + $0x44] sm:$0x1]
        %v254 = vld [vmem:[%s201 + $0x48] sm:$0xe]
        %v255 = vld [vmem:[%s201 + $0x50] sm:$0x1]
        %v256 = vld [vmem:[%s201 + $0x54] sm:$0xe]
        %v257 = vld [vmem:[%s201 + $0x5c] sm:$0x1]
        %v258 = vld [vmem:[%s201 + $0x60] sm:$0xe]
        %v259 = vld [vmem:[%s201 + $0x68] sm:$0x1]
        %v260 = vld [vmem:[%s201 + $0x6c] sm:$0xe]
        %v261 = vld [vmem:[%s201 + $0x74] sm:$0x1]
        %v262 = vld [vmem:[%s201 + $0x78] sm:$0xe]
        %v263 = vld [vmem:[%s201 + $0x80] sm:$0x1]
        %v264 = vld [vmem:[%s201 + $0x84] sm:$0xe]
        %v265 = vld [vmem:[%s201 + $0x8c] sm:$0x1]
        %v266 = vld [vmem:[%s201 + $0x90] sm:$0xe]
        %v267 = vld [vmem:[%s201 + $0x98] sm:$0x1]
        %v268 = vld [vmem:[%s201 + $0x9c] sm:$0xe]
        %v269 = vld [vmem:[%s201 + $0xa4] sm:$0x1]
        %v270 = vld [vmem:[%s201 + $0xa8] sm:$0xe]
        %v271 = vld [vmem:[%s201 + $0xb0] sm:$0x1]
        %v272 = vld [vmem:[%s201 + $0xb4] sm:$0xe]
        %v273 = vld [vmem:[%s201 + $0xbc] sm:$0x1]
        %v274 = vld [vmem:[%s201 + $0xc0] sm:$0xe]
        %v275 = vld [vmem:[%s201 + $0xc8] sm:$0x1]
        %v276 = vld [vmem:[%s201 + $0xcc] sm:$0xe]
        %v277 = vld [vmem:[%s201 + $0xd4] sm:$0x1]
        %v278 = vld [vmem:[%s201 + $0xd8] sm:$0xe]
        %v279 = vld [vmem:[%s201 + $0xe0] sm:$0x1]
        %v280 = vld [vmem:[%s201 + $0xe4] sm:$0xe]
        %v281 = vld [vmem:[%s201 + $0xec] sm:$0x1]
        %v282 = vld [vmem:[%s201] sm:$0xc]
        %v283 = vld [vmem:[%s201 + $0x8] sm:$0x3]
        %v284 = vld [vmem:[%s201 + $0xc] sm:$0xc]
        %v285 = vld [vmem:[%s201 + $0x14] sm:$0x3]
        %v286 = vld [vmem:[%s201 + $0x18] sm:$0xc]
        %v287 = vld [vmem:[%s201 + $0x20] sm:$0x3]
        %v288 = vld [vmem:[%s201 + $0x24] sm:$0xc]
        %v289 = vld [vmem:[%s201 + $0x2c] sm:$0x3]
        %v290 = vld [vmem:[%s201 + $0x30] sm:$0xc]
        %v291 = vld [vmem:[%s201 + $0x38] sm:$0x3]
        %v292 = vld [vmem:[%s201 + $0x3c] sm:$0xc]
        %v293 = vld [vmem:[%s201 + $0x44] sm:$0x3]
        %v294 = vld [vmem:[%s201 + $0x48] sm:$0xc]
        %v295 = vld [vmem:[%s201 + $0x50] sm:$0x3]
        %v296 = vld [vmem:[%s201 + $0x54] sm:$0xc]
        %v297 = vld [vmem:[%s201 + $0x5c] sm:$0x3]
        %v298 = vld [vmem:[%s201 + $0x60] sm:$0xc]
        %v299 = vld [vmem:[%s201 + $0x68] sm:$0x3]
        %v300 = vld [vmem:[%s201 + $0x6c] sm:$0xc]
        %v301 = vld [vmem:[%s201 + $0x74] sm:$0x3]
        %v302 = vld [vmem:[%s201 + $0x78] sm:$0xc]
        %v303 = vld [vmem:[%s201 + $0x80] sm:$0x3]
        %v304 = vld [vmem:[%s201 + $0x84] sm:$0xc]
        %v305 = vld [vmem:[%s201 + $0x8c] sm:$0x3]
        %v306 = vld [vmem:[%s201 + $0x90] sm:$0xc]
        %v307 = vld [vmem:[%s201 + $0x98] sm:$0x3]
        %v308 = vld [vmem:[%s201 + $0x9c] sm:$0xc]
        %v309 = vld [vmem:[%s201 + $0xa4] sm:$0x3]
        %v310 = vld [vmem:[%s201 + $0xa8] sm:$0xc]
        %v311 = vld [vmem:[%s201 + $0xb0] sm:$0x3]
        %v312 = vld [vmem:[%s201 + $0xb4] sm:$0xc]
        %v313 = vld [vmem:[%s201 + $0xbc] sm:$0x3]
        %v314 = vld [vmem:[%s201 + $0xc0] sm:$0xc]
        %v315 = vld [vmem:[%s201 + $0xc8] sm:$0x3]
        %v316 = vld [vmem:[%s201 + $0xcc] sm:$0xc]
        %v317 = vld [vmem:[%s201 + $0xd4] sm:$0x3]
        %v318 = vld [vmem:[%s201 + $0xd8] sm:$0xc]
        %v319 = vld [vmem:[%s201 + $0xe0] sm:$0x3]
        %v320 = vld [vmem:[%s201 + $0xe4] sm:$0xc]
        %v321 = vld [vmem:[%s201 + $0xec] sm:$0x3]
        %v370 = vunpack.c.l.b16 %v246
        %v371 = vunpack.c.l.b16 %v207
        %v372 = vunpack.c.l.b16 %v247
        %v373 = vunpack.c.l.b16 %v248
        %v374 = vunpack.c.l.b16 %v209
        %v375 = vunpack.c.l.b16 %v249
        %v376 = vunpack.c.l.b16 %v250
        %v377 = vunpack.c.l.b16 %v211
        %v378 = vunpack.c.l.b16 %v251
        %v379 = vunpack.c.l.b16 %v252
        %v380 = vunpack.c.l.b16 %v213
        %v381 = vunpack.c.l.b16 %v253
        %v382 = vunpack.c.l.b16 %v254
        %v383 = vunpack.c.l.b16 %v215
        %v384 = vunpack.c.l.b16 %v255
        %v385 = vunpack.c.l.b16 %v256
        %v386 = vunpack.c.l.b16 %v217
        %v387 = vunpack.c.l.b16 %v257
        %v388 = vunpack.c.l.b16 %v258
        %v389 = vunpack.c.l.b16 %v219
        %v390 = vunpack.c.l.b16 %v259
        %v391 = vunpack.c.l.b16 %v260
        %v392 = vunpack.c.l.b16 %v221
        %v393 = vunpack.c.l.b16 %v261
        %v394 = vunpack.c.l.b16 %v262
        %v395 = vunpack.c.l.b16 %v223
        %v396 = vunpack.c.l.b16 %v263
        %v397 = vunpack.c.l.b16 %v264
        %v398 = vunpack.c.l.b16 %v225
        %v399 = vunpack.c.l.b16 %v265
        %v400 = vunpack.c.l.b16 %v266
        %v401 = vunpack.c.l.b16 %v227
        %v402 = vunpack.c.l.b16 %v267
        %v403 = vunpack.c.l.b16 %v268
        %v404 = vunpack.c.l.b16 %v229
        %v405 = vunpack.c.l.b16 %v269
        %v406 = vunpack.c.l.b16 %v270
        %v407 = vunpack.c.l.b16 %v231
        %v408 = vunpack.c.l.b16 %v271
        %v409 = vunpack.c.l.b16 %v272
        %v410 = vunpack.c.l.b16 %v233
        %v411 = vunpack.c.l.b16 %v273
        %v412 = vunpack.c.l.b16 %v274
        %v413 = vunpack.c.l.b16 %v235
        %v414 = vunpack.c.l.b16 %v275
        %v415 = vunpack.c.l.b16 %v276
        %v416 = vunpack.c.l.b16 %v237
        %v417 = vunpack.c.l.b16 %v277
        %v418 = vpack.c.b16 %v371, %v370
        %v419 = vpack.c.b16 %v372, %v372
        %v420 = vpack.c.b16 %v374, %v373
        %v421 = vpack.c.b16 %v375, %v375
        %v422 = vpack.c.b16 %v377, %v376
        %v423 = vpack.c.b16 %v378, %v378
        %v424 = vpack.c.b16 %v380, %v379
        %v425 = vpack.c.b16 %v381, %v381
        %v426 = vpack.c.b16 %v383, %v382
        %v427 = vpack.c.b16 %v384, %v384
        %v428 = vpack.c.b16 %v386, %v385
        %v429 = vpack.c.b16 %v387, %v387
        %v430 = vpack.c.b16 %v389, %v388
        %v431 = vpack.c.b16 %v390, %v390
        %v432 = vpack.c.b16 %v392, %v391
        %v433 = vpack.c.b16 %v393, %v393
        %v434 = vpack.c.b16 %v395, %v394
        %v435 = vpack.c.b16 %v396, %v396
        %v436 = vpack.c.b16 %v398, %v397
        %v437 = vpack.c.b16 %v399, %v399
        %v438 = vpack.c.b16 %v401, %v400
        %v439 = vpack.c.b16 %v402, %v402
        %v440 = vpack.c.b16 %v404, %v403
        %v441 = vpack.c.b16 %v405, %v405
        %v442 = vpack.c.b16 %v407, %v406
        %v443 = vpack.c.b16 %v408, %v408
        %v444 = vpack.c.b16 %v410, %v409
        %v445 = vpack.c.b16 %v411, %v411
        %v446 = vpack.c.b16 %v413, %v412
        %v447 = vpack.c.b16 %v414, %v414
        %v448 = vpack.c.b16 %v416, %v415
        %v449 = vpack.c.b16 %v417, %v417
        %v468 = vunpack.c.l.b16 %v202
        %v469 = vunpack.c.l.b16 %v203
        %v470 = vunpack.c.l.b16 %v204
        %v471 = vunpack.c.l.b16 %v205
        %v472 = vunpack.c.l.b16 %v206
        %v473 = vunpack.c.l.b16 %v208
        %v474 = vunpack.c.l.b16 %v210
        %v475 = vunpack.c.l.b16 %v212
        %v476 = vunpack.c.l.b16 %v214
        %v477 = vunpack.c.l.b16 %v216
        %v478 = vunpack.c.l.b16 %v218
        %v479 = vunpack.c.l.b16 %v220
        %v480 = vunpack.c.l.b16 %v222
        %v481 = vunpack.c.l.b16 %v224
        %v482 = vunpack.c.l.b16 %v226
        %v483 = vunpack.c.l.b16 %v228
        %v484 = vunpack.c.l.b16 %v230
        %v485 = vunpack.c.l.b16 %v232
        %v486 = vpack.c.b16 %v469, %v468
        %v487 = vpack.c.b16 %v471, %v470
        %v488 = vpack.c.b16 %v371, %v472
        %v489 = vpack.c.b16 %v374, %v473
        %v490 = vpack.c.b16 %v377, %v474
        %v491 = vpack.c.b16 %v380, %v475
        %v492 = vpack.c.b16 %v383, %v476
        %v493 = vpack.c.b16 %v386, %v477
        %v494 = vpack.c.b16 %v389, %v478
        %v495 = vpack.c.b16 %v392, %v479
        %v496 = vpack.c.b16 %v395, %v480
        %v497 = vpack.c.b16 %v398, %v481
        %v498 = vpack.c.b16 %v401, %v482
        %v499 = vpack.c.b16 %v404, %v483
        %v500 = vpack.c.b16 %v407, %v484
        %v501 = vpack.c.b16 %v410, %v485
        %v502 = vrot.slane %v486, 7
        %v503 = vrot.slane %v487, 7
        %v504 = vrot.slane %v488, 7
        %v505 = vrot.slane %v489, 7
        %v506 = vrot.slane %v490, 7
        %v507 = vrot.slane %v491, 7
        %v508 = vrot.slane %v492, 7
        %v509 = vrot.slane %v493, 7
        %v510 = vrot.slane %v494, 7
        %v511 = vrot.slane %v495, 7
        %v512 = vrot.slane %v496, 7
        %v513 = vrot.slane %v497, 7
        %v514 = vrot.slane %v498, 7
        %v515 = vrot.slane %v499, 7
        %v516 = vrot.slane %v500, 7
        %v517 = vrot.slane %v501, 7
        %v522 = vunpack.c.l.b16 %v242
        %v523 = vunpack.c.l.b16 %v243
        %v524 = vunpack.c.l.b16 %v244
        %v525 = vunpack.c.l.b16 %v245
        %v526 = vpack.c.b16 %v469, %v522
        %v527 = vpack.c.b16 %v523, %v523
        %v528 = vpack.c.b16 %v471, %v524
        %v529 = vpack.c.b16 %v525, %v525
        %v562 = vunpack.c.l.b16 %v282
        %v563 = vunpack.c.l.b16 %v283
        %v564 = vunpack.c.l.b16 %v284
        %v565 = vunpack.c.l.b16 %v285
        %v566 = vunpack.c.l.b16 %v286
        %v567 = vunpack.c.l.b16 %v287
        %v568 = vunpack.c.l.b16 %v288
        %v569 = vunpack.c.l.b16 %v289
        %v570 = vunpack.c.l.b16 %v290
        %v571 = vunpack.c.l.b16 %v291
        %v572 = vunpack.c.l.b16 %v292
        %v573 = vunpack.c.l.b16 %v293
        %v574 = vunpack.c.l.b16 %v294
        %v575 = vunpack.c.l.b16 %v295
        %v576 = vunpack.c.l.b16 %v296
        %v577 = vunpack.c.l.b16 %v297
        %v578 = vunpack.c.l.b16 %v298
        %v579 = vunpack.c.l.b16 %v299
        %v580 = vunpack.c.l.b16 %v300
        %v581 = vunpack.c.l.b16 %v301
        %v582 = vunpack.c.l.b16 %v302
        %v583 = vunpack.c.l.b16 %v303
        %v584 = vunpack.c.l.b16 %v304
        %v585 = vunpack.c.l.b16 %v305
        %v586 = vunpack.c.l.b16 %v306
        %v587 = vunpack.c.l.b16 %v307
        %v588 = vunpack.c.l.b16 %v308
        %v589 = vunpack.c.l.b16 %v309
        %v590 = vunpack.c.l.b16 %v310
        %v591 = vunpack.c.l.b16 %v311
        %v592 = vunpack.c.l.b16 %v312
        %v593 = vunpack.c.l.b16 %v313
        %v594 = vpack.c.b16 %v469, %v562
        %v595 = vpack.c.b16 %v563, %v563
        %v596 = vpack.c.b16 %v471, %v564
        %v597 = vpack.c.b16 %v565, %v565
        %v598 = vpack.c.b16 %v371, %v566
        %v599 = vpack.c.b16 %v567, %v567
        %v600 = vpack.c.b16 %v374, %v568
        %v601 = vpack.c.b16 %v569, %v569
        %v602 = vpack.c.b16 %v377, %v570
        %v603 = vpack.c.b16 %v571, %v571
        %v604 = vpack.c.b16 %v380, %v572
        %v605 = vpack.c.b16 %v573, %v573
        %v606 = vpack.c.b16 %v383, %v574
        %v607 = vpack.c.b16 %v575, %v575
        %v608 = vpack.c.b16 %v386, %v576
        %v609 = vpack.c.b16 %v577, %v577
        %v610 = vpack.c.b16 %v389, %v578
        %v611 = vpack.c.b16 %v579, %v579
        %v612 = vpack.c.b16 %v392, %v580
        %v613 = vpack.c.b16 %v581, %v581
        %v614 = vpack.c.b16 %v395, %v582
        %v615 = vpack.c.b16 %v583, %v583
        %v616 = vpack.c.b16 %v398, %v584
        %v617 = vpack.c.b16 %v585, %v585
        %v618 = vpack.c.b16 %v401, %v586
        %v619 = vpack.c.b16 %v587, %v587
        %v620 = vpack.c.b16 %v404, %v588
        %v621 = vpack.c.b16 %v589, %v589
        %v622 = vpack.c.b16 %v407, %v590
        %v623 = vpack.c.b16 %v591, %v591
        %v624 = vpack.c.b16 %v410, %v592
        %v625 = vpack.c.b16 %v593, %v593
        %vm626 = vcmask 1046528
        %v627 = vrot.slane %v594, 1
        %v628 = vrot.slane %v595, 1
        %v629 = vsel %vm626, %v627, %v628
        %v630 = vrot.slane %v596, 1
        %v631 = vrot.slane %v597, 1
        %v632 = vsel %vm626, %v630, %v631
        %v633 = vrot.slane %v598, 1
        %v634 = vrot.slane %v599, 1
        %v635 = vsel %vm626, %v633, %v634
        %v636 = vrot.slane %v600, 1
        %v637 = vrot.slane %v601, 1
        %v638 = vsel %vm626, %v636, %v637
        %v639 = vrot.slane %v602, 1
        %v640 = vrot.slane %v603, 1
        %v641 = vsel %vm626, %v639, %v640
        %v642 = vrot.slane %v604, 1
        %v643 = vrot.slane %v605, 1
        %v644 = vsel %vm626, %v642, %v643
        %v645 = vrot.slane %v606, 1
        %v646 = vrot.slane %v607, 1
        %v647 = vsel %vm626, %v645, %v646
        %v648 = vrot.slane %v608, 1
        %v649 = vrot.slane %v609, 1
        %v650 = vsel %vm626, %v648, %v649
        %v651 = vrot.slane %v610, 1
        %v652 = vrot.slane %v611, 1
        %v653 = vsel %vm626, %v651, %v652
        %v654 = vrot.slane %v612, 1
        %v655 = vrot.slane %v613, 1
        %v656 = vsel %vm626, %v654, %v655
        %v657 = vrot.slane %v614, 1
        %v658 = vrot.slane %v615, 1
        %v659 = vsel %vm626, %v657, %v658
        %v660 = vrot.slane %v616, 1
        %v661 = vrot.slane %v617, 1
        %v662 = vsel %vm626, %v660, %v661
        %v663 = vrot.slane %v618, 1
        %v664 = vrot.slane %v619, 1
        %v665 = vsel %vm626, %v663, %v664
        %v666 = vrot.slane %v620, 1
        %v667 = vrot.slane %v621, 1
        %v668 = vsel %vm626, %v666, %v667
        %v669 = vrot.slane %v622, 1
        %v670 = vrot.slane %v623, 1
        %v671 = vsel %vm626, %v669, %v670
        %v672 = vrot.slane %v624, 1
        %v673 = vrot.slane %v625, 1
        %v674 = vsel %vm626, %v672, %v673
        %v677 = vunpack.c.l.b16 %v234
        %v678 = vunpack.c.l.b16 %v236
        %v679 = vpack.c.b16 %v413, %v677
        %v680 = vpack.c.b16 %v416, %v678
        %v681 = vrot.slane %v679, 7
        %v682 = vrot.slane %v680, 7
        %v687 = vunpack.c.l.b16 %v314
        %v688 = vunpack.c.l.b16 %v315
        %v689 = vunpack.c.l.b16 %v316
        %v690 = vunpack.c.l.b16 %v317
        %v691 = vpack.c.b16 %v413, %v687
        %v692 = vpack.c.b16 %v688, %v688
        %v693 = vpack.c.b16 %v416, %v689
        %v694 = vpack.c.b16 %v690, %v690
        %v695 = vrot.slane %v691, 1
        %v696 = vrot.slane %v692, 1
        %v697 = vsel %vm626, %v695, %v696
        %v698 = vrot.slane %v693, 1
        %v699 = vrot.slane %v694, 1
        %v700 = vsel %vm626, %v698, %v699
        %v705 = vunpack.c.l.b16 %v238
        %v706 = vunpack.c.l.b16 %v239
        %v707 = vunpack.c.l.b16 %v240
        %v708 = vunpack.c.l.b16 %v241
        %v709 = vpack.c.b16 %v706, %v705
        %v710 = vpack.c.b16 %v708, %v707
        %v711 = vrot.slane %v709, 7
        %v712 = vrot.slane %v710, 7
        %v717 = vunpack.c.l.b16 %v278
        %v718 = vunpack.c.l.b16 %v279
        %v719 = vunpack.c.l.b16 %v280
        %v720 = vunpack.c.l.b16 %v281
        %v721 = vpack.c.b16 %v706, %v717
        %v722 = vpack.c.b16 %v718, %v718
        %v723 = vpack.c.b16 %v708, %v719
        %v724 = vpack.c.b16 %v720, %v720
        %v729 = vunpack.c.l.b16 %v318
        %v730 = vunpack.c.l.b16 %v319
        %v731 = vunpack.c.l.b16 %v320
        %v732 = vunpack.c.l.b16 %v321
        %v733 = vpack.c.b16 %v706, %v729
        %v734 = vpack.c.b16 %v730, %v730
        %v735 = vpack.c.b16 %v708, %v731
        %v736 = vpack.c.b16 %v732, %v732
        %v737 = vrot.slane %v733, 1
        %v738 = vrot.slane %v734, 1
        %v739 = vsel %vm626, %v737, %v738
        %v740 = vrot.slane %v735, 1
        %v741 = vrot.slane %v736, 1
        %v742 = vsel %vm626, %v740, %v741
        %v743 = vld [vmem:[%s165] sm:$0xf]
        %v744 = vld [vmem:[%s165 + $0x4] sm:$0xf]
        %v745 = vld [vmem:[%s165 + $0x8] sm:$0xf]
        %v746 = vld [vmem:[%s165 + $0xc] sm:$0xf]
        %v747 = vld [vmem:[%s165 + $0x10] sm:$0xf]
        %v748 = vld [vmem:[%s165 + $0x14] sm:$0xf]
        %v749 = vld [vmem:[%s165 + $0x18] sm:$0xf]
        %v750 = vld [vmem:[%s165 + $0x1c] sm:$0xf]
        %v751 = vld [vmem:[%s165 + $0x20] sm:$0xf]
        %v752 = vld [vmem:[%s165 + $0x24] sm:$0xf]
        %v753 = vld [vmem:[%s165 + $0x28] sm:$0xf]
        %v754 = vld [vmem:[%s165 + $0x2c] sm:$0xf]
        %v755 = vld [vmem:[%s165 + $0x30] sm:$0xf]
        %v756 = vld [vmem:[%s165 + $0x34] sm:$0xf]
        %v757 = vld [vmem:[%s165 + $0x38] sm:$0xf]
        %v758 = vld [vmem:[%s165 + $0x3c] sm:$0xf]
        %v759 = vld [vmem:[%s165 + $0x40] sm:$0xf]
        %v760 = vld [vmem:[%s165 + $0x44] sm:$0xf]
        %v761 = vld [vmem:[%s165 + $0x48] sm:$0xf]
        %v762 = vld [vmem:[%s165 + $0x4c] sm:$0xf]
        %v763 = vld [vmem:[%s165 + $0x50] sm:$0xf]
        %v764 = vld [vmem:[%s165 + $0x54] sm:$0xf]
        %v765 = vld [vmem:[%s165 + $0x58] sm:$0xf]
        %v766 = vld [vmem:[%s165 + $0x5c] sm:$0xf]
        %v767 = vld [vmem:[%s165 + $0x60] sm:$0xf]
        %v768 = vld [vmem:[%s165 + $0x64] sm:$0xf]
        %v769 = vld [vmem:[%s165 + $0x68] sm:$0xf]
        %v770 = vld [vmem:[%s165 + $0x6c] sm:$0xf]
        %v771 = vld [vmem:[%s165 + $0x70] sm:$0xf]
        %v772 = vld [vmem:[%s165 + $0x74] sm:$0xf]
        %v773 = vld [vmem:[%s165 + $0x78] sm:$0xf]
        %v774 = vld [vmem:[%s165 + $0x7c] sm:$0xf]
        %v775 = vld [vmem:[%s165 + $0x80] sm:$0xf]
        %v776 = vld [vmem:[%s165 + $0x84] sm:$0xf]
        %v777 = vld [vmem:[%s165 + $0x88] sm:$0xf]
        %v778 = vld [vmem:[%s165 + $0x8c] sm:$0xf]
        %v779 = vld [vmem:[%s165 + $0x90] sm:$0xf]
        %v780 = vld [vmem:[%s165 + $0x94] sm:$0xf]
        %v781 = vld [vmem:[%s165 + $0x98] sm:$0xf]
        %v782 = vld [vmem:[%s165 + $0x9c] sm:$0xf]
        %v783 = vld [vmem:[%s165 + $0xa0] sm:$0xf]
        %v784 = vld [vmem:[%s165 + $0xa4] sm:$0xf]
        %v785 = vld [vmem:[%s165 + $0xa8] sm:$0xf]
        %v786 = vld [vmem:[%s165 + $0xac] sm:$0xf]
        %v787 = vld [vmem:[%s165 + $0xb0] sm:$0xf]
        %v788 = vld [vmem:[%s165 + $0xb4] sm:$0xf]
        %v789 = vld [vmem:[%s165 + $0xb8] sm:$0xf]
        %v790 = vld [vmem:[%s165 + $0xbc] sm:$0xf]
        %v791 = vld [vmem:[%s165 + $0xc0] sm:$0xf]
        %v792 = vld [vmem:[%s165 + $0xc4] sm:$0xf]
        %v793 = vld [vmem:[%s165 + $0xc8] sm:$0xf]
        %v794 = vld [vmem:[%s165 + $0xcc] sm:$0xf]
        %v795 = vld [vmem:[%s165 + $0xd0] sm:$0xf]
        %v796 = vld [vmem:[%s165 + $0xd4] sm:$0xf]
        %v797 = vld [vmem:[%s165 + $0xd8] sm:$0xf]
        %v798 = vld [vmem:[%s165 + $0xdc] sm:$0xf]
        %v799 = vld [vmem:[%s165 + $0xe0] sm:$0xf]
        %v800 = vld [vmem:[%s165 + $0xe4] sm:$0xf]
        %v801 = vld [vmem:[%s165 + $0xe8] sm:$0xf]
        %v802 = vld [vmem:[%s165 + $0xec] sm:$0xf]
        %v803 = vld [vmem:[%s165 + $0xf0] sm:$0xf]
        %v804 = vld [vmem:[%s165 + $0xf4] sm:$0xf]
        %v805 = vld [vmem:[%s165 + $0xf8] sm:$0xf]
        %v806 = vld [vmem:[%s165 + $0xfc] sm:$0xf]
        %v807 = vld [vmem:[%s165 + $0x100] sm:$0xf]
        %v808 = vld [vmem:[%s165 + $0x104] sm:$0xf]
        %v809 = vld [vmem:[%s165 + $0x108] sm:$0xf]
        %v810 = vld [vmem:[%s165 + $0x10c] sm:$0xf]
        %v811 = vld [vmem:[%s165 + $0x110] sm:$0xf]
        %v812 = vld [vmem:[%s165 + $0x114] sm:$0xf]
        %v813 = vld [vmem:[%s165 + $0x118] sm:$0xf]
        %v814 = vld [vmem:[%s165 + $0x11c] sm:$0xf]
        %v815 = vld [vmem:[%s165 + $0x120] sm:$0xf]
        %v816 = vld [vmem:[%s165 + $0x124] sm:$0xf]
        %v817 = vld [vmem:[%s165 + $0x128] sm:$0xf]
        %v818 = vld [vmem:[%s165 + $0x12c] sm:$0xf]
        %v819 = vld [vmem:[%s165 + $0x130] sm:$0xf]
        %v820 = vld [vmem:[%s165 + $0x134] sm:$0xf]
        %v821 = vld [vmem:[%s165 + $0x138] sm:$0xf]
        %v822 = vld [vmem:[%s165 + $0x13c] sm:$0xf]
        %v823 = vld [vmem:[%s165 + $0x140] sm:$0xf]
        %v824 = vld [vmem:[%s165 + $0x144] sm:$0xf]
        %v825 = vld [vmem:[%s165 + $0x148] sm:$0xf]
        %v826 = vld [vmem:[%s165 + $0x14c] sm:$0xf]
        %v827 = vld [vmem:[%s165 + $0x150] sm:$0xf]
        %v828 = vld [vmem:[%s165 + $0x154] sm:$0xf]
        %v829 = vld [vmem:[%s165 + $0x158] sm:$0xf]
        %v830 = vld [vmem:[%s165 + $0x15c] sm:$0xf]
        %v831 = vld [vmem:[%s165 + $0x160] sm:$0xf]
        %v832 = vld [vmem:[%s165 + $0x164] sm:$0xf]
        %v833 = vld [vmem:[%s165 + $0x168] sm:$0xf]
        %v834 = vld [vmem:[%s165 + $0x16c] sm:$0xf]
        %v835 = vld [vmem:[%s165 + $0x170] sm:$0xf]
        %v836 = vld [vmem:[%s165 + $0x174] sm:$0xf]
        %v837 = vld [vmem:[%s165 + $0x178] sm:$0xf]
        %v838 = vld [vmem:[%s165 + $0x17c] sm:$0xf]
        %v839 = vld [vmem:[%s165 + $0x180] sm:$0xf]
        %v840 = vld [vmem:[%s165 + $0x184] sm:$0xf]
        %v841 = vld [vmem:[%s165 + $0x188] sm:$0xf]
        %v842 = vld [vmem:[%s165 + $0x18c] sm:$0xf]
        %v843 = vld [vmem:[%s165 + $0x190] sm:$0xf]
        %v844 = vld [vmem:[%s165 + $0x194] sm:$0xf]
        %v845 = vld [vmem:[%s165 + $0x198] sm:$0xf]
        %v846 = vld [vmem:[%s165 + $0x19c] sm:$0xf]
        %v847 = vld [vmem:[%s165 + $0x1a0] sm:$0xf]
        %v848 = vld [vmem:[%s165 + $0x1a4] sm:$0xf]
        %v849 = vld [vmem:[%s165 + $0x1a8] sm:$0xf]
        %v850 = vld [vmem:[%s165 + $0x1ac] sm:$0xf]
        %v851 = vld [vmem:[%s165 + $0x1b0] sm:$0xf]
        %v852 = vld [vmem:[%s165 + $0x1b4] sm:$0xf]
        %v853 = vld [vmem:[%s165 + $0x1b8] sm:$0xf]
        %v854 = vld [vmem:[%s165 + $0x1bc] sm:$0xf]
        %v855 = vld [vmem:[%s165 + $0x1c0] sm:$0xf]
        %v856 = vld [vmem:[%s165 + $0x1c4] sm:$0xf]
        %v857 = vld [vmem:[%s165 + $0x1c8] sm:$0xf]
        %v858 = vld [vmem:[%s165 + $0x1cc] sm:$0xf]
        %v859 = vld [vmem:[%s165 + $0x1d0] sm:$0xf]
        %v860 = vld [vmem:[%s165 + $0x1d4] sm:$0xf]
        %v861 = vld [vmem:[%s165 + $0x1d8] sm:$0xf]
        %v862 = vld [vmem:[%s165 + $0x1dc] sm:$0xf]
        %v863 = vld [vmem:[%s165 + $0x1e0] sm:$0xf]
        %v864 = vld [vmem:[%s165 + $0x1e4] sm:$0xf]
        %v865 = vld [vmem:[%s165 + $0x1e8] sm:$0xf]
        %v866 = vld [vmem:[%s165 + $0x1ec] sm:$0xf]
        %v867 = vld [vmem:[%s165 + $0x1f0] sm:$0xf]
        %v868 = vld [vmem:[%s165 + $0x1f4] sm:$0xf]
        %v869 = vld [vmem:[%s165 + $0x1f8] sm:$0xf]
        %v870 = vld [vmem:[%s165 + $0x1fc] sm:$0xf]
        %v871 = vld [vmem:[%s165 + $0x200] sm:$0xf]
        %v872 = vld [vmem:[%s165 + $0x204] sm:$0xf]
        %v873 = vld [vmem:[%s165 + $0x208] sm:$0xf]
        %v874 = vld [vmem:[%s165 + $0x20c] sm:$0xf]
        %v875 = vld [vmem:[%s165 + $0x210] sm:$0xf]
        %v876 = vld [vmem:[%s165 + $0x214] sm:$0xf]
        %v877 = vld [vmem:[%s165 + $0x218] sm:$0xf]
        %v878 = vld [vmem:[%s165 + $0x21c] sm:$0xf]
        %v879 = vld [vmem:[%s165 + $0x220] sm:$0xf]
        %v880 = vld [vmem:[%s165 + $0x224] sm:$0xf]
        %v881 = vld [vmem:[%s165 + $0x228] sm:$0xf]
        %v882 = vld [vmem:[%s165 + $0x22c] sm:$0xf]
        %v883 = vld [vmem:[%s165 + $0x230] sm:$0xf]
        %v884 = vld [vmem:[%s165 + $0x234] sm:$0xf]
        %v885 = vld [vmem:[%s165 + $0x238] sm:$0xf]
        %v886 = vld [vmem:[%s165 + $0x23c] sm:$0xf]
        %v887 = vrot.slane %v418, 1
        %v888 = vrot.slane %v419, 1
        %v889 = vsel %vm626, %v887, %v888
        %v890 = vrot.slane %v502, 1
        %v891 = vsel %vm626, %v890, %v890
        %v892 = vrot.slane %v526, 1
        %v893 = vrot.slane %v527, 1
        %v894 = vsel %vm626, %v892, %v893
        %v895 = vrot.slane %v629, 1
        %v896 = vrot.slane %v628, 1
        %v897 = vsel %vm626, %v895, %v896
        %v898 = vrot.slane %v504, 1
        %v899 = vsel %vm626, %v898, %v898
        %v900 = vrot.slane %v635, 1
        %v901 = vrot.slane %v634, 1
        %v902 = vsel %vm626, %v900, %v901
        %v903 = vrot.slane %v506, 1
        %v904 = vsel %vm626, %v903, %v903
        %v905 = vrot.slane %v422, 1
        %v906 = vrot.slane %v423, 1
        %v907 = vsel %vm626, %v905, %v906
        %v908 = vrot.slane %v641, 1
        %v909 = vrot.slane %v640, 1
        %v910 = vsel %vm626, %v908, %v909
        %v911 = vrot.slane %v420, 1
        %v912 = vrot.slane %v421, 1
        %v913 = vsel %vm626, %v911, %v912
        %v914 = vrot.slane %v503, 1
        %v915 = vsel %vm626, %v914, %v914
        %v916 = vrot.slane %v528, 1
        %v917 = vrot.slane %v529, 1
        %v918 = vsel %vm626, %v916, %v917
        %v919 = vrot.slane %v632, 1
        %v920 = vrot.slane %v631, 1
        %v921 = vsel %vm626, %v919, %v920
        %v922 = vrot.slane %v505, 1
        %v923 = vsel %vm626, %v922, %v922
        %v924 = vrot.slane %v638, 1
        %v925 = vrot.slane %v637, 1
        %v926 = vsel %vm626, %v924, %v925
        %v927 = vrot.slane %v507, 1
        %v928 = vsel %vm626, %v927, %v927
        %v929 = vrot.slane %v424, 1
        %v930 = vrot.slane %v425, 1
        %v931 = vsel %vm626, %v929, %v930
        %v932 = vrot.slane %v644, 1
        %v933 = vrot.slane %v643, 1
        %v934 = vsel %vm626, %v932, %v933
        %v935 = vrot.slane %v508, 1
        %v936 = vsel %vm626, %v935, %v935
        %v937 = vrot.slane %v426, 1
        %v938 = vrot.slane %v427, 1
        %v939 = vsel %vm626, %v937, %v938
        %v940 = vrot.slane %v647, 1
        %v941 = vrot.slane %v646, 1
        %v942 = vsel %vm626, %v940, %v941
        %v943 = vrot.slane %v509, 1
        %v944 = vsel %vm626, %v943, %v943
        %v945 = vrot.slane %v428, 1
        %v946 = vrot.slane %v429, 1
        %v947 = vsel %vm626, %v945, %v946
        %v948 = vrot.slane %v650, 1
        %v949 = vrot.slane %v649, 1
        %v950 = vsel %vm626, %v948, %v949
        %v951 = vrot.slane %v510, 1
        %v952 = vsel %vm626, %v951, %v951
        %v953 = vrot.slane %v430, 1
        %v954 = vrot.slane %v431, 1
        %v955 = vsel %vm626, %v953, %v954
        %v956 = vrot.slane %v653, 1
        %v957 = vrot.slane %v652, 1
        %v958 = vsel %vm626, %v956, %v957
        %v959 = vrot.slane %v511, 1
        %v960 = vsel %vm626, %v959, %v959
        %v961 = vrot.slane %v432, 1
        %v962 = vrot.slane %v433, 1
        %v963 = vsel %vm626, %v961, %v962
        %v964 = vrot.slane %v656, 1
        %v965 = vrot.slane %v655, 1
        %v966 = vsel %vm626, %v964, %v965
        %v967 = vrot.slane %v512, 1
        %v968 = vsel %vm626, %v967, %v967
        %v969 = vrot.slane %v434, 1
        %v970 = vrot.slane %v435, 1
        %v971 = vsel %vm626, %v969, %v970
        %v972 = vrot.slane %v659, 1
        %v973 = vrot.slane %v658, 1
        %v974 = vsel %vm626, %v972, %v973
        %v975 = vrot.slane %v513, 1
        %v976 = vsel %vm626, %v975, %v975
        %v977 = vrot.slane %v436, 1
        %v978 = vrot.slane %v437, 1
        %v979 = vsel %vm626, %v977, %v978
        %v980 = vrot.slane %v662, 1
        %v981 = vrot.slane %v661, 1
        %v982 = vsel %vm626, %v980, %v981
        %v983 = vrot.slane %v514, 1
        %v984 = vsel %vm626, %v983, %v983
        %v985 = vrot.slane %v438, 1
        %v986 = vrot.slane %v439, 1
        %v987 = vsel %vm626, %v985, %v986
        %v988 = vrot.slane %v665, 1
        %v989 = vrot.slane %v664, 1
        %v990 = vsel %vm626, %v988, %v989
        %v991 = vrot.slane %v515, 1
        %v992 = vsel %vm626, %v991, %v991
        %v993 = vrot.slane %v440, 1
        %v994 = vrot.slane %v441, 1
        %v995 = vsel %vm626, %v993, %v994
        %v996 = vrot.slane %v668, 1
        %v997 = vrot.slane %v667, 1
        %v998 = vsel %vm626, %v996, %v997
        %v999 = vrot.slane %v516, 1
        %v1000 = vsel %vm626, %v999, %v999
        %v1001 = vrot.slane %v442, 1
        %v1002 = vrot.slane %v443, 1
        %v1003 = vsel %vm626, %v1001, %v1002
        %v1004 = vrot.slane %v671, 1
        %v1005 = vrot.slane %v670, 1
        %v1006 = vsel %vm626, %v1004, %v1005
        %v1007 = vrot.slane %v517, 1
        %v1008 = vsel %vm626, %v1007, %v1007
        %v1009 = vrot.slane %v444, 1
        %v1010 = vrot.slane %v445, 1
        %v1011 = vsel %vm626, %v1009, %v1010
        %v1012 = vrot.slane %v674, 1
        %v1013 = vrot.slane %v673, 1
        %v1014 = vsel %vm626, %v1012, %v1013
        %v1015 = vrot.slane %v681, 1
        %v1016 = vsel %vm626, %v1015, %v1015
        %v1017 = vrot.slane %v446, 1
        %v1018 = vrot.slane %v447, 1
        %v1019 = vsel %vm626, %v1017, %v1018
        %v1020 = vrot.slane %v697, 1
        %v1021 = vrot.slane %v696, 1
        %v1022 = vsel %vm626, %v1020, %v1021
        %v1023 = vrot.slane %v682, 1
        %v1024 = vsel %vm626, %v1023, %v1023
        %v1025 = vrot.slane %v448, 1
        %v1026 = vrot.slane %v449, 1
        %v1027 = vsel %vm626, %v1025, %v1026
        %v1028 = vrot.slane %v700, 1
        %v1029 = vrot.slane %v699, 1
        %v1030 = vsel %vm626, %v1028, %v1029
        %v1031 = vrot.slane %v711, 1
        %v1032 = vsel %vm626, %v1031, %v1031
        %v1033 = vrot.slane %v721, 1
        %v1034 = vrot.slane %v722, 1
        %v1035 = vsel %vm626, %v1033, %v1034
        %v1036 = vrot.slane %v739, 1
        %v1037 = vrot.slane %v738, 1
        %v1038 = vsel %vm626, %v1036, %v1037
        %v1039 = vrot.slane %v712, 1
        %v1040 = vsel %vm626, %v1039, %v1039
        %v1041 = vrot.slane %v723, 1
        %v1042 = vrot.slane %v724, 1
        %v1043 = vsel %vm626, %v1041, %v1042
        %v1044 = vrot.slane %v742, 1
        %v1045 = vrot.slane %v741, 1
        %v1046 = vsel %vm626, %v1044, %v1045
        %v1251 = vunpack.c.l.b16 %v743
        %v1252 = vunpack.c.l.b16 %v744
        %v1253 = vunpack.c.l.b16 %v745
        %v1254 = vunpack.c.l.b16 %v746
        %v1255 = vunpack.c.l.b16 %v747
        %v1256 = vunpack.c.l.b16 %v748
        %v1257 = vunpack.c.l.b16 %v749
        %v1258 = vunpack.c.l.b16 %v750
        %v1259 = vunpack.c.l.b16 %v751
        %v1260 = vunpack.c.l.b16 %v752
        %v1261 = vunpack.c.l.b16 %v753
        %v1262 = vunpack.c.l.b16 %v754
        %v1263 = vunpack.c.l.b16 %v755
        %v1264 = vunpack.c.l.b16 %v756
        %v1265 = vunpack.c.l.b16 %v757
        %v1266 = vunpack.c.l.b16 %v758
        %v1267 = vunpack.c.l.b16 %v759
        %v1268 = vunpack.c.l.b16 %v760
        %v1269 = vunpack.c.l.b16 %v761
        %v1270 = vunpack.c.l.b16 %v762
        %v1271 = vunpack.c.l.b16 %v763
        %v1272 = vunpack.c.l.b16 %v764
        %v1273 = vunpack.c.l.b16 %v765
        %v1274 = vunpack.c.l.b16 %v766
        %v1275 = vunpack.c.l.b16 %v767
        %v1276 = vunpack.c.l.b16 %v768
        %v1277 = vunpack.c.l.b16 %v769
        %v1278 = vunpack.c.l.b16 %v770
        %v1279 = vunpack.c.l.b16 %v771
        %v1280 = vunpack.c.l.b16 %v772
        %v1281 = vunpack.c.l.b16 %v773
        %v1282 = vunpack.c.l.b16 %v774
        %v1283 = vunpack.c.l.b16 %v775
        %v1284 = vunpack.c.l.b16 %v776
        %v1285 = vunpack.c.l.b16 %v777
        %v1286 = vunpack.c.l.b16 %v778
        %v1287 = vunpack.c.l.b16 %v779
        %v1288 = vunpack.c.l.b16 %v780
        %v1289 = vunpack.c.l.b16 %v781
        %v1290 = vunpack.c.l.b16 %v782
        %v1291 = vunpack.c.l.b16 %v783
        %v1292 = vunpack.c.l.b16 %v784
        %v1293 = vunpack.c.l.b16 %v785
        %v1294 = vunpack.c.l.b16 %v786
        %v1295 = vunpack.c.l.b16 %v787
        %v1296 = vunpack.c.l.b16 %v788
        %v1297 = vunpack.c.l.b16 %v789
        %v1298 = vunpack.c.l.b16 %v790
        %v1299 = vunpack.c.l.b16 %v791
        %v1300 = vunpack.c.l.b16 %v792
        %v1301 = vunpack.c.l.b16 %v793
        %v1302 = vunpack.c.l.b16 %v794
        %v1303 = vunpack.c.l.b16 %v795
        %v1304 = vunpack.c.l.b16 %v796
        %v1305 = vunpack.c.l.b16 %v797
        %v1306 = vunpack.c.l.b16 %v798
        %v1307 = vunpack.c.l.b16 %v799
        %v1308 = vunpack.c.l.b16 %v800
        %v1309 = vunpack.c.l.b16 %v801
        %v1310 = vunpack.c.l.b16 %v802
        %v1311 = vunpack.c.l.b16 %v803
        %v1312 = vunpack.c.l.b16 %v804
        %v1313 = vunpack.c.l.b16 %v805
        %v1314 = vunpack.c.l.b16 %v806
        %v1315 = vunpack.c.l.b16 %v807
        %v1316 = vunpack.c.l.b16 %v808
        %v1317 = vunpack.c.l.b16 %v809
        %v1318 = vunpack.c.l.b16 %v810
        %v1319 = vunpack.c.l.b16 %v811
        %v1320 = vunpack.c.l.b16 %v812
        %v1321 = vunpack.c.l.b16 %v813
        %v1322 = vunpack.c.l.b16 %v814
        %v1323 = vunpack.c.l.b16 %v815
        %v1324 = vunpack.c.l.b16 %v816
        %v1325 = vunpack.c.l.b16 %v817
        %v1326 = vunpack.c.l.b16 %v818
        %v1327 = vunpack.c.l.b16 %v819
        %v1328 = vunpack.c.l.b16 %v820
        %v1329 = vunpack.c.l.b16 %v821
        %v1330 = vunpack.c.l.b16 %v822
        %v1331 = vunpack.c.l.b16 %v823
        %v1332 = vunpack.c.l.b16 %v824
        %v1333 = vunpack.c.l.b16 %v825
        %v1334 = vunpack.c.l.b16 %v826
        %v1335 = vunpack.c.l.b16 %v827
        %v1336 = vunpack.c.l.b16 %v828
        %v1337 = vunpack.c.l.b16 %v829
        %v1338 = vunpack.c.l.b16 %v830
        %v1339 = vunpack.c.l.b16 %v831
        %v1340 = vunpack.c.l.b16 %v832
        %v1341 = vunpack.c.l.b16 %v833
        %v1342 = vunpack.c.l.b16 %v834
        %v1343 = vunpack.c.l.b16 %v835
        %v1344 = vunpack.c.l.b16 %v836
        %v1345 = vunpack.c.l.b16 %v837
        %v1346 = vunpack.c.l.b16 %v838
        %v1347 = vunpack.c.l.b16 %v839
        %v1348 = vunpack.c.l.b16 %v840
        %v1349 = vunpack.c.l.b16 %v841
        %v1350 = vunpack.c.l.b16 %v842
        %v1351 = vunpack.c.l.b16 %v843
        %v1352 = vunpack.c.l.b16 %v844
        %v1353 = vunpack.c.l.b16 %v845
        %v1354 = vunpack.c.l.b16 %v846
        %v1355 = vunpack.c.l.b16 %v847
        %v1356 = vunpack.c.l.b16 %v848
        %v1357 = vunpack.c.l.b16 %v849
        %v1358 = vunpack.c.l.b16 %v850
        %v1359 = vunpack.c.l.b16 %v851
        %v1360 = vunpack.c.l.b16 %v852
        %v1361 = vunpack.c.l.b16 %v853
        %v1362 = vunpack.c.l.b16 %v854
        %v1363 = vunpack.c.l.b16 %v855
        %v1364 = vunpack.c.l.b16 %v856
        %v1365 = vunpack.c.l.b16 %v857
        %v1366 = vunpack.c.l.b16 %v858
        %v1367 = vunpack.c.l.b16 %v859
        %v1368 = vunpack.c.l.b16 %v860
        %v1369 = vunpack.c.l.b16 %v861
        %v1370 = vunpack.c.l.b16 %v862
        %v1371 = vunpack.c.l.b16 %v863
        %v1372 = vunpack.c.l.b16 %v864
        %v1373 = vunpack.c.l.b16 %v865
        %v1374 = vunpack.c.l.b16 %v866
        %v1375 = vunpack.c.l.b16 %v867
        %v1376 = vunpack.c.l.b16 %v868
        %v1377 = vunpack.c.l.b16 %v869
        %v1378 = vunpack.c.l.b16 %v870
        %v1379 = vunpack.c.l.b16 %v871
        %v1380 = vunpack.c.l.b16 %v872
        %v1381 = vunpack.c.l.b16 %v873
        %v1382 = vunpack.c.l.b16 %v874
        %v1383 = vunpack.c.l.b16 %v875
        %v1384 = vunpack.c.l.b16 %v876
        %v1385 = vunpack.c.l.b16 %v877
        %v1386 = vunpack.c.l.b16 %v878
        %v1387 = vunpack.c.l.b16 %v879
        %v1388 = vunpack.c.l.b16 %v880
        %v1389 = vunpack.c.l.b16 %v881
        %v1390 = vunpack.c.l.b16 %v882
        %v1391 = vunpack.c.l.b16 %v883
        %v1392 = vunpack.c.l.b16 %v884
        %v1393 = vunpack.c.l.b16 %v885
        %v1394 = vunpack.c.l.b16 %v886
        %v1395 = vpack.c.b16 %v1252, %v1251
        %v1396 = vpack.c.b16 %v1254, %v1253
        %v1397 = vpack.c.b16 %v1256, %v1255
        %v1398 = vpack.c.b16 %v1258, %v1257
        %v1399 = vpack.c.b16 %v1260, %v1259
        %v1400 = vpack.c.b16 %v1262, %v1261
        %v1401 = vpack.c.b16 %v1264, %v1263
        %v1402 = vpack.c.b16 %v1266, %v1265
        %v1403 = vpack.c.b16 %v1268, %v1267
        %v1404 = vpack.c.b16 %v1270, %v1269
        %v1405 = vpack.c.b16 %v1272, %v1271
        %v1406 = vpack.c.b16 %v1274, %v1273
        %v1407 = vpack.c.b16 %v1276, %v1275
        %v1408 = vpack.c.b16 %v1278, %v1277
        %v1409 = vpack.c.b16 %v1280, %v1279
        %v1410 = vpack.c.b16 %v1282, %v1281
        %v1411 = vpack.c.b16 %v1284, %v1283
        %v1412 = vpack.c.b16 %v1286, %v1285
        %v1413 = vpack.c.b16 %v1288, %v1287
        %v1414 = vpack.c.b16 %v1290, %v1289
        %v1415 = vpack.c.b16 %v1292, %v1291
        %v1416 = vpack.c.b16 %v1294, %v1293
        %v1417 = vpack.c.b16 %v1296, %v1295
        %v1418 = vpack.c.b16 %v1298, %v1297
        %v1419 = vpack.c.b16 %v1300, %v1299
        %v1420 = vpack.c.b16 %v1302, %v1301
        %v1421 = vpack.c.b16 %v1304, %v1303
        %v1422 = vpack.c.b16 %v1306, %v1305
        %v1423 = vpack.c.b16 %v1308, %v1307
        %v1424 = vpack.c.b16 %v1310, %v1309
        %v1425 = vpack.c.b16 %v1312, %v1311
        %v1426 = vpack.c.b16 %v1314, %v1313
        %v1427 = vpack.c.b16 %v1316, %v1315
        %v1428 = vpack.c.b16 %v1318, %v1317
        %v1429 = vpack.c.b16 %v1320, %v1319
        %v1430 = vpack.c.b16 %v1322, %v1321
        %v1431 = vpack.c.b16 %v1324, %v1323
        %v1432 = vpack.c.b16 %v1326, %v1325
        %v1433 = vpack.c.b16 %v1328, %v1327
        %v1434 = vpack.c.b16 %v1330, %v1329
        %v1435 = vpack.c.b16 %v1332, %v1331
        %v1436 = vpack.c.b16 %v1334, %v1333
        %v1437 = vpack.c.b16 %v1336, %v1335
        %v1438 = vpack.c.b16 %v1338, %v1337
        %v1439 = vpack.c.b16 %v1340, %v1339
        %v1440 = vpack.c.b16 %v1342, %v1341
        %v1441 = vpack.c.b16 %v1344, %v1343
        %v1442 = vpack.c.b16 %v1346, %v1345
        %v1443 = vpack.c.b16 %v1348, %v1347
        %v1444 = vpack.c.b16 %v1350, %v1349
        %v1445 = vpack.c.b16 %v1352, %v1351
        %v1446 = vpack.c.b16 %v1354, %v1353
        %v1447 = vpack.c.b16 %v1356, %v1355
        %v1448 = vpack.c.b16 %v1358, %v1357
        %v1449 = vpack.c.b16 %v1360, %v1359
        %v1450 = vpack.c.b16 %v1362, %v1361
        %v1451 = vpack.c.b16 %v1364, %v1363
        %v1452 = vpack.c.b16 %v1366, %v1365
        %v1453 = vpack.c.b16 %v1368, %v1367
        %v1454 = vpack.c.b16 %v1370, %v1369
        %v1455 = vpack.c.b16 %v1372, %v1371
        %v1456 = vpack.c.b16 %v1374, %v1373
        %v1457 = vpack.c.b16 %v1376, %v1375
        %v1458 = vpack.c.b16 %v1378, %v1377
        %v1459 = vpack.c.b16 %v1380, %v1379
        %v1460 = vpack.c.b16 %v1382, %v1381
        %v1461 = vpack.c.b16 %v1384, %v1383
        %v1462 = vpack.c.b16 %v1386, %v1385
        %v1463 = vpack.c.b16 %v1388, %v1387
        %v1464 = vpack.c.b16 %v1390, %v1389
        %v1465 = vpack.c.b16 %v1392, %v1391
        %v1466 = vpack.c.b16 %v1394, %v1393
        %1539 = vmatprep.subr.bf16.mxu0 0
        %1540 = vmatpush1.bf16.msra.mxu0 %v1395
        %1541 = vmatprep.subr.bf16.mxu0 0
        %1542 = vmatpush1.bf16.msra.mxu0 %v1396
        %1543 = vmatprep.subr.bf16.mxu0 0
        %1544 = vmatpush1.bf16.msra.mxu0 %v1397
        %1545 = vmatprep.subr.bf16.mxu0 0
        %1546 = vmatpush1.bf16.msra.mxu0 %v1398
        %1547 = vmatprep.subr.bf16.mxu0 0
        %1548 = vmatpush1.bf16.msra.mxu0 %v1399
        %1549 = vmatprep.subr.bf16.mxu0 0
        %1550 = vmatpush1.bf16.msra.mxu0 %v1400
        %1551 = vmatprep.subr.bf16.mxu0 0
        %1552 = vmatpush1.bf16.msra.mxu0 %v1401
        %1553 = vmatprep.subr.bf16.mxu0 0
        %1554 = vmatpush1.bf16.msra.mxu0 %v1402
        %1555 = vmatprep.subr.bf16.mxu0 0
        %1556 = vmatpush1.bf16.msra.mxu0 %v1403
        %1557 = vmatprep.subr.bf16.mxu0 0
        %1558 = vmatpush1.bf16.msra.mxu0 %v1404
        %1559 = vmatprep.subr.bf16.mxu0 0
        %1560 = vmatpush1.bf16.msra.mxu0 %v1405
        %1561 = vmatprep.subr.bf16.mxu0 0
        %1562 = vmatpush1.bf16.msra.mxu0 %v1406
        %1563 = vmatprep.subr.bf16.mxu0 0
        %1564 = vmatpush1.bf16.msra.mxu0 %v1407
        %1565 = vmatprep.subr.bf16.mxu0 0
        %1566 = vmatpush1.bf16.msra.mxu0 %v1408
        %1567 = vmatprep.subr.bf16.mxu0 0
        %1568 = vmatpush1.bf16.msra.mxu0 %v1409
        %1569 = vmatprep.subr.bf16.mxu0 0
        %1570 = vmatpush1.bf16.msra.mxu0 %v1410
        %1571 = vmatprep.mubr.bf16.mxu0 %v891
        %1572 = vmatmul.mubr.bf16.gmra.mrb[0].mxu0 %v889
        %v1573 = vpop.f32.mrb[0].mxu0
        %v1574 = vadd.f32 0.0, %v1573
        %v1575 = vpop.f32.mrb[0].mxu0
        %v1576 = vpop.f32.mrb[0].mxu0
        %v1577 = vadd.f32 0.0, %v1576
        %v1578 = vpop.f32.mrb[0].mxu0
        %1579 = vmatprep.mubr.bf16.mxu0 %v915
        %1580 = vmatmul.mubr.bf16.gmra.mrb[0].mxu0 %v913
        %v1581 = vpop.f32.mrb[0].mxu0
        %v1582 = vadd.f32 0.0, %v1581
        %v1583 = vpop.f32.mrb[0].mxu0
        %v1584 = vpop.f32.mrb[0].mxu0
        %v1585 = vadd.f32 0.0, %v1584
        %v1586 = vpop.f32.mrb[0].mxu0
        %1587 = vmatprep.mubr.bf16.mxu0 %v899
        %1588 = vmatmul.mubr.bf16.gmra.mrb[0].mxu0 %v907
        %v1589 = vpop.f32.mrb[0].mxu0
        %v1590 = vadd.f32 0.0, %v1589
        %v1591 = vpop.f32.mrb[0].mxu0
        %v1592 = vpop.f32.mrb[0].mxu0
        %v1593 = vadd.f32 0.0, %v1592
        %v1594 = vpop.f32.mrb[0].mxu0
        %1595 = vmatprep.mubr.bf16.mxu0 %v923
        %1596 = vmatmul.mubr.bf16.gmra.mrb[0].mxu0 %v931
        %v1597 = vpop.f32.mrb[0].mxu0
        %v1598 = vadd.f32 0.0, %v1597
        %v1599 = vpop.f32.mrb[0].mxu0
        %v1600 = vpop.f32.mrb[0].mxu0
        %v1601 = vadd.f32 0.0, %v1600
        %v1602 = vpop.f32.mrb[0].mxu0
        %1603 = vmatprep.mubr.bf16.mxu0 %v904
        %1604 = vmatmul.mubr.bf16.gmra.mrb[0].mxu0 %v939
        %v1605 = vpop.f32.mrb[0].mxu0
        %v1606 = vadd.f32 0.0, %v1605
        %v1607 = vpop.f32.mrb[0].mxu0
        %v1608 = vpop.f32.mrb[0].mxu0
        %v1609 = vadd.f32 0.0, %v1608
        %v1610 = vpop.f32.mrb[0].mxu0
        %1611 = vmatprep.mubr.bf16.mxu0 %v928
        %1612 = vmatmul.mubr.bf16.gmra.mrb[0].mxu0 %v947
        %v1613 = vpop.f32.mrb[0].mxu0
        %v1614 = vadd.f32 0.0, %v1613
        %v1615 = vpop.f32.mrb[0].mxu0
        %v1616 = vpop.f32.mrb[0].mxu0
        %v1617 = vadd.f32 0.0, %v1616
        %v1618 = vpop.f32.mrb[0].mxu0
        %1619 = vmatprep.mubr.bf16.mxu0 %v936
        %1620 = vmatmul.mubr.bf16.gmra.mrb[0].mxu0 %v955
        %v1621 = vpop.f32.mrb[0].mxu0
        %v1622 = vadd.f32 0.0, %v1621
        %v1623 = vpop.f32.mrb[0].mxu0
        %v1624 = vpop.f32.mrb[0].mxu0
        %v1625 = vadd.f32 0.0, %v1624
        %v1626 = vpop.f32.mrb[0].mxu0
        %1627 = vmatprep.mubr.bf16.mxu0 %v944
        %1628 = vmatmul.mubr.bf16.gmra.mrb[0].mxu0 %v963
        %v1629 = vpop.f32.mrb[0].mxu0
        %v1630 = vadd.f32 0.0, %v1629
        %v1631 = vpop.f32.mrb[0].mxu0
        %v1632 = vpop.f32.mrb[0].mxu0
        %v1633 = vadd.f32 0.0, %v1632
        %v1634 = vpop.f32.mrb[0].mxu0
        %1635 = vmatprep.mubr.bf16.mxu0 %v952
        %1636 = vmatmul.mubr.bf16.gmra.mrb[0].mxu0 %v971
        %v1637 = vpop.f32.mrb[0].mxu0
        %v1638 = vadd.f32 0.0, %v1637
        %v1639 = vpop.f32.mrb[0].mxu0
        %v1640 = vpop.f32.mrb[0].mxu0
        %v1641 = vadd.f32 0.0, %v1640
        %v1642 = vpop.f32.mrb[0].mxu0
        %1643 = vmatprep.mubr.bf16.mxu0 %v960
        %1644 = vmatmul.mubr.bf16.gmra.mrb[0].mxu0 %v979
        %v1645 = vpop.f32.mrb[0].mxu0
        %v1646 = vadd.f32 0.0, %v1645
        %v1647 = vpop.f32.mrb[0].mxu0
        %v1648 = vpop.f32.mrb[0].mxu0
        %v1649 = vadd.f32 0.0, %v1648
        %v1650 = vpop.f32.mrb[0].mxu0
        %1651 = vmatprep.mubr.bf16.mxu0 %v968
        %1652 = vmatmul.mubr.bf16.gmra.mrb[0].mxu0 %v987
        %v1653 = vpop.f32.mrb[0].mxu0
        %v1654 = vadd.f32 0.0, %v1653
        %v1655 = vpop.f32.mrb[0].mxu0
        %v1656 = vpop.f32.mrb[0].mxu0
        %v1657 = vadd.f32 0.0, %v1656
        %v1658 = vpop.f32.mrb[0].mxu0
        %1659 = vmatprep.mubr.bf16.mxu0 %v976
        %1660 = vmatmul.mubr.bf16.gmra.mrb[0].mxu0 %v995
        %v1661 = vpop.f32.mrb[0].mxu0
        %v1662 = vadd.f32 0.0, %v1661
        %v1663 = vpop.f32.mrb[0].mxu0
        %v1664 = vpop.f32.mrb[0].mxu0
        %v1665 = vadd.f32 0.0, %v1664
        %v1666 = vpop.f32.mrb[0].mxu0
        %1667 = vmatprep.mubr.bf16.mxu0 %v984
        %1668 = vmatmul.mubr.bf16.gmra.mrb[0].mxu0 %v1003
        %v1669 = vpop.f32.mrb[0].mxu0
        %v1670 = vadd.f32 0.0, %v1669
        %v1671 = vpop.f32.mrb[0].mxu0
        %v1672 = vpop.f32.mrb[0].mxu0
        %v1673 = vadd.f32 0.0, %v1672
        %v1674 = vpop.f32.mrb[0].mxu0
        %1675 = vmatprep.mubr.bf16.mxu0 %v992
        %1676 = vmatmul.mubr.bf16.gmra.mrb[0].mxu0 %v1011
        %v1677 = vpop.f32.mrb[0].mxu0
        %v1678 = vadd.f32 0.0, %v1677
        %v1679 = vpop.f32.mrb[0].mxu0
        %v1680 = vpop.f32.mrb[0].mxu0
        %v1681 = vadd.f32 0.0, %v1680
        %v1682 = vpop.f32.mrb[0].mxu0
        %1683 = vmatprep.mubr.bf16.mxu0 %v1000
        %1684 = vmatmul.mubr.bf16.gmra.mrb[0].mxu0 %v1019
        %v1685 = vpop.f32.mrb[0].mxu0
        %v1686 = vadd.f32 0.0, %v1685
        %v1687 = vpop.f32.mrb[0].mxu0
        %v1688 = vpop.f32.mrb[0].mxu0
        %v1689 = vadd.f32 0.0, %v1688
        %v1690 = vpop.f32.mrb[0].mxu0
        %1691 = vmatprep.mubr.bf16.mxu0 %v1008
        %1692 = vmatmul.mubr.bf16.gmra.mrb[0].mxu0 %v1027
        %v1693 = vpop.f32.mrb[0].mxu0
        %v1694 = vadd.f32 0.0, %v1693
        %v1695 = vpop.f32.mrb[0].mxu0
        %v1696 = vpop.f32.mrb[0].mxu0
        %v1697 = vadd.f32 0.0, %v1696
        %v1698 = vpop.f32.mrb[0].mxu0
        %1699 = vdwg.mxu0
        %1700 = vmatprep.subr.bf16.mxu0 0
        %1701 = vmatpush1.bf16.msra.mxu0 %v1411
        %1702 = vmatprep.subr.bf16.mxu0 0
        %1703 = vmatpush1.bf16.msra.mxu0 %v1412
        %1704 = vmatprep.subr.bf16.mxu0 0
        %1705 = vmatpush1.bf16.msra.mxu0 %v1413
        %1706 = vmatprep.subr.bf16.mxu0 0
        %1707 = vmatpush1.bf16.msra.mxu0 %v1414
        %1708 = vmatprep.subr.bf16.mxu0 0
        %1709 = vmatpush1.bf16.msra.mxu0 %v1415
        %1710 = vmatprep.subr.bf16.mxu0 0
        %1711 = vmatpush1.bf16.msra.mxu0 %v1416
        %1712 = vmatprep.subr.bf16.mxu0 0
        %1713 = vmatpush1.bf16.msra.mxu0 %v1417
        %1714 = vmatprep.subr.bf16.mxu0 0
        %1715 = vmatpush1.bf16.msra.mxu0 %v1418
        %1716 = vmatprep.subr.bf16.mxu0 0
        %1717 = vmatpush1.bf16.msra.mxu0 %v1419
        %1718 = vmatprep.subr.bf16.mxu0 0
        %1719 = vmatpush1.bf16.msra.mxu0 %v1420
        %1720 = vmatprep.subr.bf16.mxu0 0
        %1721 = vmatpush1.bf16.msra.mxu0 %v1421
        %1722 = vmatprep.subr.bf16.mxu0 0
        %1723 = vmatpush1.bf16.msra.mxu0 %v1422
        %1724 = vmatprep.subr.bf16.mxu0 0
        %1725 = vmatpush1.bf16.msra.mxu0 %v1423
        %1726 = vmatprep.subr.bf16.mxu0 0
        %1727 = vmatpush1.bf16.msra.mxu0 %v1424
        %1728 = vmatprep.subr.bf16.mxu0 0
        %1729 = vmatpush1.bf16.msra.mxu0 %v1425
        %1730 = vmatprep.subr.bf16.mxu0 0
        %1731 = vmatpush1.bf16.msra.mxu0 %v1426
        %1732 = vmatprep.mubr.bf16.mxu0 %v897
        %1733 = vmatmul.mubr.bf16.gmra.mrb[0].mxu0 %v894
        %v1734 = vpop.f32.mrb[0].mxu0
        %v1735 = vadd.f32 %v1574, %v1734
        %v1736 = vpop.f32.mrb[0].mxu0
        %v1737 = vpop.f32.mrb[0].mxu0
        %v1738 = vadd.f32 %v1577, %v1737
        %v1739 = vpop.f32.mrb[0].mxu0
        %1740 = vmatprep.mubr.bf16.mxu0 %v921
        %1741 = vmatmul.mubr.bf16.gmra.mrb[0].mxu0 %v918
        %v1742 = vpop.f32.mrb[0].mxu0
        %v1743 = vadd.f32 %v1582, %v1742
        %v1744 = vpop.f32.mrb[0].mxu0
        %v1745 = vpop.f32.mrb[0].mxu0
        %v1746 = vadd.f32 %v1585, %v1745
        %v1747 = vpop.f32.mrb[0].mxu0
        %1748 = vmatprep.mubr.bf16.mxu0 %v902
        %1749 = vmatmul.mubr.bf16.gmra.mrb[0].mxu0 %v889
        %v1750 = vpop.f32.mrb[0].mxu0
        %v1751 = vadd.f32 %v1590, %v1750
        %v1752 = vpop.f32.mrb[0].mxu0
        %v1753 = vpop.f32.mrb[0].mxu0
        %v1754 = vadd.f32 %v1593, %v1753
        %v1755 = vpop.f32.mrb[0].mxu0
        %1756 = vmatprep.mubr.bf16.mxu0 %v926
        %1757 = vmatmul.mubr.bf16.gmra.mrb[0].mxu0 %v913
        %v1758 = vpop.f32.mrb[0].mxu0
        %v1759 = vadd.f32 %v1598, %v1758
        %v1760 = vpop.f32.mrb[0].mxu0
        %v1761 = vpop.f32.mrb[0].mxu0
        %v1762 = vadd.f32 %v1601, %v1761
        %v1763 = vpop.f32.mrb[0].mxu0
        %1764 = vmatprep.mubr.bf16.mxu0 %v910
        %1765 = vmatmul.mubr.bf16.gmra.mrb[0].mxu0 %v907
        %v1766 = vpop.f32.mrb[0].mxu0
        %v1767 = vadd.f32 %v1606, %v1766
        %v1768 = vpop.f32.mrb[0].mxu0
        %v1769 = vpop.f32.mrb[0].mxu0
        %v1770 = vadd.f32 %v1609, %v1769
        %v1771 = vpop.f32.mrb[0].mxu0
        %1772 = vmatprep.mubr.bf16.mxu0 %v934
        %1773 = vmatmul.mubr.bf16.gmra.mrb[0].mxu0 %v931
        %v1774 = vpop.f32.mrb[0].mxu0
        %v1775 = vadd.f32 %v1614, %v1774
        %v1776 = vpop.f32.mrb[0].mxu0
        %v1777 = vpop.f32.mrb[0].mxu0
        %v1778 = vadd.f32 %v1617, %v1777
        %v1779 = vpop.f32.mrb[0].mxu0
        %1780 = vmatprep.mubr.bf16.mxu0 %v942
        %1781 = vmatmul.mubr.bf16.gmra.mrb[0].mxu0 %v939
        %v1782 = vpop.f32.mrb[0].mxu0
        %v1783 = vadd.f32 %v1622, %v1782
        %v1784 = vpop.f32.mrb[0].mxu0
        %v1785 = vpop.f32.mrb[0].mxu0
        %v1786 = vadd.f32 %v1625, %v1785
        %v1787 = vpop.f32.mrb[0].mxu0
        %1788 = vmatprep.mubr.bf16.mxu0 %v950
        %1789 = vmatmul.mubr.bf16.gmra.mrb[0].mxu0 %v947
        %v1790 = vpop.f32.mrb[0].mxu0
        %v1791 = vadd.f32 %v1630, %v1790
        %v1792 = vpop.f32.mrb[0].mxu0
        %v1793 = vpop.f32.mrb[0].mxu0
        %v1794 = vadd.f32 %v1633, %v1793
        %v1795 = vpop.f32.mrb[0].mxu0
        %1796 = vmatprep.mubr.bf16.mxu0 %v958
        %1797 = vmatmul.mubr.bf16.gmra.mrb[0].mxu0 %v955
        %v1798 = vpop.f32.mrb[0].mxu0
        %v1799 = vadd.f32 %v1638, %v1798
        %v1800 = vpop.f32.mrb[0].mxu0
        %v1801 = vpop.f32.mrb[0].mxu0
        %v1802 = vadd.f32 %v1641, %v1801
        %v1803 = vpop.f32.mrb[0].mxu0
        %1804 = vmatprep.mubr.bf16.mxu0 %v966
        %1805 = vmatmul.mubr.bf16.gmra.mrb[0].mxu0 %v963
        %v1806 = vpop.f32.mrb[0].mxu0
        %v1807 = vadd.f32 %v1646, %v1806
        %v1808 = vpop.f32.mrb[0].mxu0
        %v1809 = vpop.f32.mrb[0].mxu0
        %v1810 = vadd.f32 %v1649, %v1809
        %v1811 = vpop.f32.mrb[0].mxu0
        %1812 = vmatprep.mubr.bf16.mxu0 %v974
        %1813 = vmatmul.mubr.bf16.gmra.mrb[0].mxu0 %v971
        %v1814 = vpop.f32.mrb[0].mxu0
        %v1815 = vadd.f32 %v1654, %v1814
        %v1816 = vpop.f32.mrb[0].mxu0
        %v1817 = vpop.f32.mrb[0].mxu0
        %v1818 = vadd.f32 %v1657, %v1817
        %v1819 = vpop.f32.mrb[0].mxu0
        %1820 = vmatprep.mubr.bf16.mxu0 %v982
        %1821 = vmatmul.mubr.bf16.gmra.mrb[0].mxu0 %v979
        %v1822 = vpop.f32.mrb[0].mxu0
        %v1823 = vadd.f32 %v1662, %v1822
        %v1824 = vpop.f32.mrb[0].mxu0
        %v1825 = vpop.f32.mrb[0].mxu0
        %v1826 = vadd.f32 %v1665, %v1825
        %v1827 = vpop.f32.mrb[0].mxu0
        %1828 = vmatprep.mubr.bf16.mxu0 %v990
        %1829 = vmatmul.mubr.bf16.gmra.mrb[0].mxu0 %v987
        %v1830 = vpop.f32.mrb[0].mxu0
        %v1831 = vadd.f32 %v1670, %v1830
        %v1832 = vpop.f32.mrb[0].mxu0
        %v1833 = vpop.f32.mrb[0].mxu0
        %v1834 = vadd.f32 %v1673, %v1833
        %v1835 = vpop.f32.mrb[0].mxu0
        %1836 = vmatprep.mubr.bf16.mxu0 %v998
        %1837 = vmatmul.mubr.bf16.gmra.mrb[0].mxu0 %v995
        %v1838 = vpop.f32.mrb[0].mxu0
        %v1839 = vadd.f32 %v1678, %v1838
        %v1840 = vpop.f32.mrb[0].mxu0
        %v1841 = vpop.f32.mrb[0].mxu0
        %v1842 = vadd.f32 %v1681, %v1841
        %v1843 = vpop.f32.mrb[0].mxu0
        %1844 = vmatprep.mubr.bf16.mxu0 %v1006
        %1845 = vmatmul.mubr.bf16.gmra.mrb[0].mxu0 %v1003
        %v1846 = vpop.f32.mrb[0].mxu0
        %v1847 = vadd.f32 %v1686, %v1846
        %v1848 = vpop.f32.mrb[0].mxu0
        %v1849 = vpop.f32.mrb[0].mxu0
        %v1850 = vadd.f32 %v1689, %v1849
        %v1851 = vpop.f32.mrb[0].mxu0
        %1852 = vmatprep.mubr.bf16.mxu0 %v1014
        %1853 = vmatmul.mubr.bf16.gmra.mrb[0].mxu0 %v1011
        %v1854 = vpop.f32.mrb[0].mxu0
        %v1855 = vadd.f32 %v1694, %v1854
        %v1856 = vpop.f32.mrb[0].mxu0
        %v1857 = vpop.f32.mrb[0].mxu0
        %v1858 = vadd.f32 %v1697, %v1857
        %v1859 = vpop.f32.mrb[0].mxu0
        %1860 = vdwg.mxu0
        %1861 = vmatprep.subr.bf16.mxu0 0
        %1862 = vmatpush1.bf16.msra.mxu0 %v1427
        %1863 = vmatprep.subr.bf16.mxu0 0
        %1864 = vmatpush1.bf16.msra.mxu0 %v1428
        %1865 = vmatprep.subr.bf16.mxu0 0
        %1866 = vmatpush1.bf16.msra.mxu0 %v1429
        %1867 = vmatprep.subr.bf16.mxu0 0
        %1868 = vmatpush1.bf16.msra.mxu0 %v1430
        %1869 = vmatprep.subr.bf16.mxu0 0
        %1870 = vmatpush1.bf16.msra.mxu0 %v1431
        %1871 = vmatprep.subr.bf16.mxu0 0
        %1872 = vmatpush1.bf16.msra.mxu0 %v1432
        %1873 = vmatprep.subr.bf16.mxu0 0
        %1874 = vmatpush1.bf16.msra.mxu0 %v1433
        %1875 = vmatprep.subr.bf16.mxu0 0
        %1876 = vmatpush1.bf16.msra.mxu0 %v1434
        %1877 = vmatprep.subr.bf16.mxu0 0
        %1878 = vmatpush1.bf16.msra.mxu0 %v1435
        %1879 = vmatprep.subr.bf16.mxu0 0
        %1880 = vmatpush1.bf16.msra.mxu0 %v1436
        %1881 = vmatprep.subr.bf16.mxu0 0
        %1882 = vmatpush1.bf16.msra.mxu0 %v1437
        %1883 = vmatprep.subr.bf16.mxu0 0
        %1884 = vmatpush1.bf16.msra.mxu0 %v1438
        %1885 = vmatprep.subr.bf16.mxu0 0
        %1886 = vmatpush1.bf16.msra.mxu0 %v1439
        %1887 = vmatprep.subr.bf16.mxu0 0
        %1888 = vmatpush1.bf16.msra.mxu0 %v1440
        %1889 = vmatprep.subr.bf16.mxu0 0
        %1890 = vmatpush1.bf16.msra.mxu0 %v1441
        %1891 = vmatprep.subr.bf16.mxu0 0
        %1892 = vmatpush1.bf16.msra.mxu0 %v1442
        %1893 = vmatprep.mubr.bf16.mxu0 %v902
        %1894 = vmatmul.mubr.bf16.gmra.mrb[0].mxu0 %v899
        %v1895 = vpop.f32.mrb[0].mxu0
        %v1896 = vadd.f32 %v1735, %v1895
        %v1897 = vpop.f32.mrb[0].mxu0
        %v1898 = vpop.f32.mrb[0].mxu0
        %v1899 = vadd.f32 %v1738, %v1898
        %v1900 = vpop.f32.mrb[0].mxu0
        %1901 = vmatprep.mubr.bf16.mxu0 %v926
        %1902 = vmatmul.mubr.bf16.gmra.mrb[0].mxu0 %v923
        %v1903 = vpop.f32.mrb[0].mxu0
        %v1904 = vadd.f32 %v1743, %v1903
        %v1905 = vpop.f32.mrb[0].mxu0
        %v1906 = vpop.f32.mrb[0].mxu0
        %v1907 = vadd.f32 %v1746, %v1906
        %v1908 = vpop.f32.mrb[0].mxu0
        %1909 = vmatprep.mubr.bf16.mxu0 %v910
        %1910 = vmatmul.mubr.bf16.gmra.mrb[0].mxu0 %v904
        %v1911 = vpop.f32.mrb[0].mxu0
        %v1912 = vadd.f32 %v1751, %v1911
        %v1913 = vpop.f32.mrb[0].mxu0
        %v1914 = vpop.f32.mrb[0].mxu0
        %v1915 = vadd.f32 %v1754, %v1914
        %v1916 = vpop.f32.mrb[0].mxu0
        %1917 = vmatprep.mubr.bf16.mxu0 %v934
        %1918 = vmatmul.mubr.bf16.gmra.mrb[0].mxu0 %v928
        %v1919 = vpop.f32.mrb[0].mxu0
        %v1920 = vadd.f32 %v1759, %v1919
        %v1921 = vpop.f32.mrb[0].mxu0
        %v1922 = vpop.f32.mrb[0].mxu0
        %v1923 = vadd.f32 %v1762, %v1922
        %v1924 = vpop.f32.mrb[0].mxu0
        %1925 = vmatprep.mubr.bf16.mxu0 %v942
        %1926 = vmatmul.mubr.bf16.gmra.mrb[0].mxu0 %v936
        %v1927 = vpop.f32.mrb[0].mxu0
        %v1928 = vadd.f32 %v1767, %v1927
        %v1929 = vpop.f32.mrb[0].mxu0
        %v1930 = vpop.f32.mrb[0].mxu0
        %v1931 = vadd.f32 %v1770, %v1930
        %v1932 = vpop.f32.mrb[0].mxu0
        %1933 = vmatprep.mubr.bf16.mxu0 %v950
        %1934 = vmatmul.mubr.bf16.gmra.mrb[0].mxu0 %v944
        %v1935 = vpop.f32.mrb[0].mxu0
        %v1936 = vadd.f32 %v1775, %v1935
        %v1937 = vpop.f32.mrb[0].mxu0
        %v1938 = vpop.f32.mrb[0].mxu0
        %v1939 = vadd.f32 %v1778, %v1938
        %v1940 = vpop.f32.mrb[0].mxu0
        %1941 = vmatprep.mubr.bf16.mxu0 %v958
        %1942 = vmatmul.mubr.bf16.gmra.mrb[0].mxu0 %v952
        %v1943 = vpop.f32.mrb[0].mxu0
        %v1944 = vadd.f32 %v1783, %v1943
        %v1945 = vpop.f32.mrb[0].mxu0
        %v1946 = vpop.f32.mrb[0].mxu0
        %v1947 = vadd.f32 %v1786, %v1946
        %v1948 = vpop.f32.mrb[0].mxu0
        %1949 = vmatprep.mubr.bf16.mxu0 %v966
        %1950 = vmatmul.mubr.bf16.gmra.mrb[0].mxu0 %v960
        %v1951 = vpop.f32.mrb[0].mxu0
        %v1952 = vadd.f32 %v1791, %v1951
        %v1953 = vpop.f32.mrb[0].mxu0
        %v1954 = vpop.f32.mrb[0].mxu0
        %v1955 = vadd.f32 %v1794, %v1954
        %v1956 = vpop.f32.mrb[0].mxu0
        %1957 = vmatprep.mubr.bf16.mxu0 %v974
        %1958 = vmatmul.mubr.bf16.gmra.mrb[0].mxu0 %v968
        %v1959 = vpop.f32.mrb[0].mxu0
        %v1960 = vadd.f32 %v1799, %v1959
        %v1961 = vpop.f32.mrb[0].mxu0
        %v1962 = vpop.f32.mrb[0].mxu0
        %v1963 = vadd.f32 %v1802, %v1962
        %v1964 = vpop.f32.mrb[0].mxu0
        %1965 = vmatprep.mubr.bf16.mxu0 %v982
        %1966 = vmatmul.mubr.bf16.gmra.mrb[0].mxu0 %v976
        %v1967 = vpop.f32.mrb[0].mxu0
        %v1968 = vadd.f32 %v1807, %v1967
        %v1969 = vpop.f32.mrb[0].mxu0
        %v1970 = vpop.f32.mrb[0].mxu0
        %v1971 = vadd.f32 %v1810, %v1970
        %v1972 = vpop.f32.mrb[0].mxu0
        %1973 = vmatprep.mubr.bf16.mxu0 %v990
        %1974 = vmatmul.mubr.bf16.gmra.mrb[0].mxu0 %v984
        %v1975 = vpop.f32.mrb[0].mxu0
        %v1976 = vadd.f32 %v1815, %v1975
        %v1977 = vpop.f32.mrb[0].mxu0
        %v1978 = vpop.f32.mrb[0].mxu0
        %v1979 = vadd.f32 %v1818, %v1978
        %v1980 = vpop.f32.mrb[0].mxu0
        %1981 = vmatprep.mubr.bf16.mxu0 %v998
        %1982 = vmatmul.mubr.bf16.gmra.mrb[0].mxu0 %v992
        %v1983 = vpop.f32.mrb[0].mxu0
        %v1984 = vadd.f32 %v1823, %v1983
        %v1985 = vpop.f32.mrb[0].mxu0
        %v1986 = vpop.f32.mrb[0].mxu0
        %v1987 = vadd.f32 %v1826, %v1986
        %v1988 = vpop.f32.mrb[0].mxu0
        %1989 = vmatprep.mubr.bf16.mxu0 %v1006
        %1990 = vmatmul.mubr.bf16.gmra.mrb[0].mxu0 %v1000
        %v1991 = vpop.f32.mrb[0].mxu0
        %v1992 = vadd.f32 %v1831, %v1991
        %v1993 = vpop.f32.mrb[0].mxu0
        %v1994 = vpop.f32.mrb[0].mxu0
        %v1995 = vadd.f32 %v1834, %v1994
        %v1996 = vpop.f32.mrb[0].mxu0
        %1997 = vmatprep.mubr.bf16.mxu0 %v1014
        %1998 = vmatmul.mubr.bf16.gmra.mrb[0].mxu0 %v1008
        %v1999 = vpop.f32.mrb[0].mxu0
        %v2000 = vadd.f32 %v1839, %v1999
        %v2001 = vpop.f32.mrb[0].mxu0
        %v2002 = vpop.f32.mrb[0].mxu0
        %v2003 = vadd.f32 %v1842, %v2002
        %v2004 = vpop.f32.mrb[0].mxu0
        %2005 = vmatprep.mubr.bf16.mxu0 %v1022
        %2006 = vmatmul.mubr.bf16.gmra.mrb[0].mxu0 %v1016
        %v2007 = vpop.f32.mrb[0].mxu0
        %v2008 = vadd.f32 %v1847, %v2007
        %v2009 = vpop.f32.mrb[0].mxu0
        %v2010 = vpop.f32.mrb[0].mxu0
        %v2011 = vadd.f32 %v1850, %v2010
        %v2012 = vpop.f32.mrb[0].mxu0
        %2013 = vmatprep.mubr.bf16.mxu0 %v1030
        %2014 = vmatmul.mubr.bf16.gmra.mrb[0].mxu0 %v1024
        %v2015 = vpop.f32.mrb[0].mxu0
        %v2016 = vadd.f32 %v1855, %v2015
        %v2017 = vpop.f32.mrb[0].mxu0
        %v2018 = vpop.f32.mrb[0].mxu0
        %v2019 = vadd.f32 %v1858, %v2018
        %v2020 = vpop.f32.mrb[0].mxu0
        %2021 = vdwg.mxu0
        %2022 = vmatprep.subr.bf16.mxu0 0
        %2023 = vmatpush1.bf16.msra.mxu0 %v1443
        %2024 = vmatprep.subr.bf16.mxu0 0
        %2025 = vmatpush1.bf16.msra.mxu0 %v1444
        %2026 = vmatprep.subr.bf16.mxu0 0
        %2027 = vmatpush1.bf16.msra.mxu0 %v1445
        %2028 = vmatprep.subr.bf16.mxu0 0
        %2029 = vmatpush1.bf16.msra.mxu0 %v1446
        %2030 = vmatprep.subr.bf16.mxu0 0
        %2031 = vmatpush1.bf16.msra.mxu0 %v1447
        %2032 = vmatprep.subr.bf16.mxu0 0
        %2033 = vmatpush1.bf16.msra.mxu0 %v1448
        %2034 = vmatprep.subr.bf16.mxu0 0
        %2035 = vmatpush1.bf16.msra.mxu0 %v1449
        %2036 = vmatprep.subr.bf16.mxu0 0
        %2037 = vmatpush1.bf16.msra.mxu0 %v1450
        %2038 = vmatprep.subr.bf16.mxu0 0
        %2039 = vmatpush1.bf16.msra.mxu0 %v1451
        %2040 = vmatprep.subr.bf16.mxu0 0
        %2041 = vmatpush1.bf16.msra.mxu0 %v1452
        %2042 = vmatprep.subr.bf16.mxu0 0
        %2043 = vmatpush1.bf16.msra.mxu0 %v1453
        %2044 = vmatprep.subr.bf16.mxu0 0
        %2045 = vmatpush1.bf16.msra.mxu0 %v1454
        %2046 = vmatprep.subr.bf16.mxu0 0
        %2047 = vmatpush1.bf16.msra.mxu0 %v1455
        %2048 = vmatprep.subr.bf16.mxu0 0
        %2049 = vmatpush1.bf16.msra.mxu0 %v1456
        %2050 = vmatprep.subr.bf16.mxu0 0
        %2051 = vmatpush1.bf16.msra.mxu0 %v1457
        %2052 = vmatprep.subr.bf16.mxu0 0
        %2053 = vmatpush1.bf16.msra.mxu0 %v1458
        %2054 = vmatprep.mubr.bf16.mxu0 %v907
        %2055 = vmatmul.mubr.bf16.gmra.mrb[0].mxu0 %v904
        %v2056 = vpop.f32.mrb[0].mxu0
        %v2057 = vadd.f32 %v1896, %v2056
        %v2058 = vpop.f32.mrb[0].mxu0
        %v2059 = vpop.f32.mrb[0].mxu0
        %v2060 = vadd.f32 %v1899, %v2059
        %v2061 = vpop.f32.mrb[0].mxu0
        %2062 = vmatprep.mubr.bf16.mxu0 %v931
        %2063 = vmatmul.mubr.bf16.gmra.mrb[0].mxu0 %v928
        %v2064 = vpop.f32.mrb[0].mxu0
        %v2065 = vadd.f32 %v1904, %v2064
        %v2066 = vpop.f32.mrb[0].mxu0
        %v2067 = vpop.f32.mrb[0].mxu0
        %v2068 = vadd.f32 %v1907, %v2067
        %v2069 = vpop.f32.mrb[0].mxu0
        %2070 = vmatprep.mubr.bf16.mxu0 %v939
        %2071 = vmatmul.mubr.bf16.gmra.mrb[0].mxu0 %v936
        %v2072 = vpop.f32.mrb[0].mxu0
        %v2073 = vadd.f32 %v1912, %v2072
        %v2074 = vpop.f32.mrb[0].mxu0
        %v2075 = vpop.f32.mrb[0].mxu0
        %v2076 = vadd.f32 %v1915, %v2075
        %v2077 = vpop.f32.mrb[0].mxu0
        %2078 = vmatprep.mubr.bf16.mxu0 %v947
        %2079 = vmatmul.mubr.bf16.gmra.mrb[0].mxu0 %v944
        %v2080 = vpop.f32.mrb[0].mxu0
        %v2081 = vadd.f32 %v1920, %v2080
        %v2082 = vpop.f32.mrb[0].mxu0
        %v2083 = vpop.f32.mrb[0].mxu0
        %v2084 = vadd.f32 %v1923, %v2083
        %v2085 = vpop.f32.mrb[0].mxu0
        %2086 = vmatprep.mubr.bf16.mxu0 %v955
        %2087 = vmatmul.mubr.bf16.gmra.mrb[0].mxu0 %v952
        %v2088 = vpop.f32.mrb[0].mxu0
        %v2089 = vadd.f32 %v1928, %v2088
        %v2090 = vpop.f32.mrb[0].mxu0
        %v2091 = vpop.f32.mrb[0].mxu0
        %v2092 = vadd.f32 %v1931, %v2091
        %v2093 = vpop.f32.mrb[0].mxu0
        %2094 = vmatprep.mubr.bf16.mxu0 %v963
        %2095 = vmatmul.mubr.bf16.gmra.mrb[0].mxu0 %v960
        %v2096 = vpop.f32.mrb[0].mxu0
        %v2097 = vadd.f32 %v1936, %v2096
        %v2098 = vpop.f32.mrb[0].mxu0
        %v2099 = vpop.f32.mrb[0].mxu0
        %v2100 = vadd.f32 %v1939, %v2099
        %v2101 = vpop.f32.mrb[0].mxu0
        %2102 = vmatprep.mubr.bf16.mxu0 %v971
        %2103 = vmatmul.mubr.bf16.gmra.mrb[0].mxu0 %v968
        %v2104 = vpop.f32.mrb[0].mxu0
        %v2105 = vadd.f32 %v1944, %v2104
        %v2106 = vpop.f32.mrb[0].mxu0
        %v2107 = vpop.f32.mrb[0].mxu0
        %v2108 = vadd.f32 %v1947, %v2107
        %v2109 = vpop.f32.mrb[0].mxu0
        %2110 = vmatprep.mubr.bf16.mxu0 %v979
        %2111 = vmatmul.mubr.bf16.gmra.mrb[0].mxu0 %v976
        %v2112 = vpop.f32.mrb[0].mxu0
        %v2113 = vadd.f32 %v1952, %v2112
        %v2114 = vpop.f32.mrb[0].mxu0
        %v2115 = vpop.f32.mrb[0].mxu0
        %v2116 = vadd.f32 %v1955, %v2115
        %v2117 = vpop.f32.mrb[0].mxu0
        %2118 = vmatprep.mubr.bf16.mxu0 %v987
        %2119 = vmatmul.mubr.bf16.gmra.mrb[0].mxu0 %v984
        %v2120 = vpop.f32.mrb[0].mxu0
        %v2121 = vadd.f32 %v1960, %v2120
        %v2122 = vpop.f32.mrb[0].mxu0
        %v2123 = vpop.f32.mrb[0].mxu0
        %v2124 = vadd.f32 %v1963, %v2123
        %v2125 = vpop.f32.mrb[0].mxu0
        %2126 = vmatprep.mubr.bf16.mxu0 %v995
        %2127 = vmatmul.mubr.bf16.gmra.mrb[0].mxu0 %v992
        %v2128 = vpop.f32.mrb[0].mxu0
        %v2129 = vadd.f32 %v1968, %v2128
        %v2130 = vpop.f32.mrb[0].mxu0
        %v2131 = vpop.f32.mrb[0].mxu0
        %v2132 = vadd.f32 %v1971, %v2131
        %v2133 = vpop.f32.mrb[0].mxu0
        %2134 = vmatprep.mubr.bf16.mxu0 %v1003
        %2135 = vmatmul.mubr.bf16.gmra.mrb[0].mxu0 %v1000
        %v2136 = vpop.f32.mrb[0].mxu0
        %v2137 = vadd.f32 %v1976, %v2136
        %v2138 = vpop.f32.mrb[0].mxu0
        %v2139 = vpop.f32.mrb[0].mxu0
        %v2140 = vadd.f32 %v1979, %v2139
        %v2141 = vpop.f32.mrb[0].mxu0
        %2142 = vmatprep.mubr.bf16.mxu0 %v1011
        %2143 = vmatmul.mubr.bf16.gmra.mrb[0].mxu0 %v1008
        %v2144 = vpop.f32.mrb[0].mxu0
        %v2145 = vadd.f32 %v1984, %v2144
        %v2146 = vpop.f32.mrb[0].mxu0
        %v2147 = vpop.f32.mrb[0].mxu0
        %v2148 = vadd.f32 %v1987, %v2147
        %v2149 = vpop.f32.mrb[0].mxu0
        %2150 = vmatprep.mubr.bf16.mxu0 %v1019
        %2151 = vmatmul.mubr.bf16.gmra.mrb[0].mxu0 %v1016
        %v2152 = vpop.f32.mrb[0].mxu0
        %v2153 = vadd.f32 %v1992, %v2152
        %v2154 = vpop.f32.mrb[0].mxu0
        %v2155 = vpop.f32.mrb[0].mxu0
        %v2156 = vadd.f32 %v1995, %v2155
        %v2157 = vpop.f32.mrb[0].mxu0
        %2158 = vmatprep.mubr.bf16.mxu0 %v1027
        %2159 = vmatmul.mubr.bf16.gmra.mrb[0].mxu0 %v1024
        %v2160 = vpop.f32.mrb[0].mxu0
        %v2161 = vadd.f32 %v2000, %v2160
        %v2162 = vpop.f32.mrb[0].mxu0
        %v2163 = vpop.f32.mrb[0].mxu0
        %v2164 = vadd.f32 %v2003, %v2163
        %v2165 = vpop.f32.mrb[0].mxu0
        %2166 = vmatprep.mubr.bf16.mxu0 %v1035
        %2167 = vmatmul.mubr.bf16.gmra.mrb[0].mxu0 %v1032
        %v2168 = vpop.f32.mrb[0].mxu0
        %v2169 = vadd.f32 %v2008, %v2168
        %v2170 = vpop.f32.mrb[0].mxu0
        %v2171 = vpop.f32.mrb[0].mxu0
        %v2172 = vadd.f32 %v2011, %v2171
        %v2173 = vpop.f32.mrb[0].mxu0
        %2174 = vmatprep.mubr.bf16.mxu0 %v1043
        %2175 = vmatmul.mubr.bf16.gmra.mrb[0].mxu0 %v1040
        %v2176 = vpop.f32.mrb[0].mxu0
        %v2177 = vadd.f32 %v2016, %v2176
        %v2178 = vpop.f32.mrb[0].mxu0
        %v2179 = vpop.f32.mrb[0].mxu0
        %v2180 = vadd.f32 %v2019, %v2179
        %v2181 = vpop.f32.mrb[0].mxu0
        %2182 = vdwg.mxu0
        %2183 = vmatprep.subr.bf16.mxu0 0
        %2184 = vmatpush1.bf16.msra.mxu0 %v1459
        %2185 = vmatprep.subr.bf16.mxu0 0
        %2186 = vmatpush1.bf16.msra.mxu0 %v1460
        %2187 = vmatprep.subr.bf16.mxu0 0
        %2188 = vmatpush1.bf16.msra.mxu0 %v1461
        %2189 = vmatprep.subr.bf16.mxu0 0
        %2190 = vmatpush1.bf16.msra.mxu0 %v1462
        %2191 = vmatprep.subr.bf16.mxu0 0
        %2192 = vmatpush1.bf16.msra.mxu0 %v1463
        %2193 = vmatprep.subr.bf16.mxu0 0
        %2194 = vmatpush1.bf16.msra.mxu0 %v1464
        %2195 = vmatprep.subr.bf16.mxu0 0
        %2196 = vmatpush1.bf16.msra.mxu0 %v1465
        %2197 = vmatprep.subr.bf16.mxu0 0
        %2198 = vmatpush1.bf16.msra.mxu0 %v1466
        %2199 = vmatprep.subr.bf16.mxu0 0
        %2200 = vmatpush1.bf16.msra.mxu0 0
        %2201 = vmatprep.subr.bf16.mxu0 0
        %2202 = vmatpush1.bf16.msra.mxu0 0
        %2203 = vmatprep.subr.bf16.mxu0 0
        %2204 = vmatpush1.bf16.msra.mxu0 0
        %2205 = vmatprep.subr.bf16.mxu0 0
        %2206 = vmatpush1.bf16.msra.mxu0 0
        %2207 = vmatprep.subr.bf16.mxu0 0
        %2208 = vmatpush1.bf16.msra.mxu0 0
        %2209 = vmatprep.subr.bf16.mxu0 0
        %2210 = vmatpush1.bf16.msra.mxu0 0
        %2211 = vmatprep.subr.bf16.mxu0 0
        %2212 = vmatpush1.bf16.msra.mxu0 0
        %2213 = vmatprep.subr.bf16.mxu0 0
        %2214 = vmatpush1.bf16.msra.mxu0 0
        %2215 = vmatprep.mubr.bf16.mxu0 0
        %2216 = vmatmul.mubr.bf16.gmra.mrb[0].mxu0 %v910
        %v2217 = vpop.f32.mrb[0].mxu0
        %v2218 = vadd.f32 %v2057, %v2217
        %v2219 = vpop.f32.mrb[0].mxu0
        %v2220 = vpop.f32.mrb[0].mxu0
        %v2221 = vadd.f32 %v2060, %v2220
        %v2222 = vpop.f32.mrb[0].mxu0
        %2223 = vmatprep.mubr.bf16.mxu0 0
        %2224 = vmatmul.mubr.bf16.gmra.mrb[0].mxu0 %v934
        %v2225 = vpop.f32.mrb[0].mxu0
        %v2226 = vadd.f32 %v2065, %v2225
        %v2227 = vpop.f32.mrb[0].mxu0
        %v2228 = vpop.f32.mrb[0].mxu0
        %v2229 = vadd.f32 %v2068, %v2228
        %v2230 = vpop.f32.mrb[0].mxu0
        %2231 = vmatprep.mubr.bf16.mxu0 0
        %2232 = vmatmul.mubr.bf16.gmra.mrb[0].mxu0 %v942
        %v2233 = vpop.f32.mrb[0].mxu0
        %v2234 = vadd.f32 %v2073, %v2233
        %v2235 = vpop.f32.mrb[0].mxu0
        %v2236 = vpop.f32.mrb[0].mxu0
        %v2237 = vadd.f32 %v2076, %v2236
        %v2238 = vpop.f32.mrb[0].mxu0
        %2239 = vmatprep.mubr.bf16.mxu0 0
        %2240 = vmatmul.mubr.bf16.gmra.mrb[0].mxu0 %v950
        %v2241 = vpop.f32.mrb[0].mxu0
        %v2242 = vadd.f32 %v2081, %v2241
        %v2243 = vpop.f32.mrb[0].mxu0
        %v2244 = vpop.f32.mrb[0].mxu0
        %v2245 = vadd.f32 %v2084, %v2244
        %v2246 = vpop.f32.mrb[0].mxu0
        %2247 = vmatprep.mubr.bf16.mxu0 0
        %2248 = vmatmul.mubr.bf16.gmra.mrb[0].mxu0 %v958
        %v2249 = vpop.f32.mrb[0].mxu0
        %v2250 = vadd.f32 %v2089, %v2249
        %v2251 = vpop.f32.mrb[0].mxu0
        %v2252 = vpop.f32.mrb[0].mxu0
        %v2253 = vadd.f32 %v2092, %v2252
        %v2254 = vpop.f32.mrb[0].mxu0
        %2255 = vmatprep.mubr.bf16.mxu0 0
        %2256 = vmatmul.mubr.bf16.gmra.mrb[0].mxu0 %v966
        %v2257 = vpop.f32.mrb[0].mxu0
        %v2258 = vadd.f32 %v2097, %v2257
        %v2259 = vpop.f32.mrb[0].mxu0
        %v2260 = vpop.f32.mrb[0].mxu0
        %v2261 = vadd.f32 %v2100, %v2260
        %v2262 = vpop.f32.mrb[0].mxu0
        %2263 = vmatprep.mubr.bf16.mxu0 0
        %2264 = vmatmul.mubr.bf16.gmra.mrb[0].mxu0 %v974
        %v2265 = vpop.f32.mrb[0].mxu0
        %v2266 = vadd.f32 %v2105, %v2265
        %v2267 = vpop.f32.mrb[0].mxu0
        %v2268 = vpop.f32.mrb[0].mxu0
        %v2269 = vadd.f32 %v2108, %v2268
        %v2270 = vpop.f32.mrb[0].mxu0
        %2271 = vmatprep.mubr.bf16.mxu0 0
        %2272 = vmatmul.mubr.bf16.gmra.mrb[0].mxu0 %v982
        %v2273 = vpop.f32.mrb[0].mxu0
        %v2274 = vadd.f32 %v2113, %v2273
        %v2275 = vpop.f32.mrb[0].mxu0
        %v2276 = vpop.f32.mrb[0].mxu0
        %v2277 = vadd.f32 %v2116, %v2276
        %v2278 = vpop.f32.mrb[0].mxu0
        %2279 = vmatprep.mubr.bf16.mxu0 0
        %2280 = vmatmul.mubr.bf16.gmra.mrb[0].mxu0 %v990
        %v2281 = vpop.f32.mrb[0].mxu0
        %v2282 = vadd.f32 %v2121, %v2281
        %v2283 = vpop.f32.mrb[0].mxu0
        %v2284 = vpop.f32.mrb[0].mxu0
        %v2285 = vadd.f32 %v2124, %v2284
        %v2286 = vpop.f32.mrb[0].mxu0
        %2287 = vmatprep.mubr.bf16.mxu0 0
        %2288 = vmatmul.mubr.bf16.gmra.mrb[0].mxu0 %v998
        %v2289 = vpop.f32.mrb[0].mxu0
        %v2290 = vadd.f32 %v2129, %v2289
        %v2291 = vpop.f32.mrb[0].mxu0
        %v2292 = vpop.f32.mrb[0].mxu0
        %v2293 = vadd.f32 %v2132, %v2292
        %v2294 = vpop.f32.mrb[0].mxu0
        %2295 = vmatprep.mubr.bf16.mxu0 0
        %2296 = vmatmul.mubr.bf16.gmra.mrb[0].mxu0 %v1006
        %v2297 = vpop.f32.mrb[0].mxu0
        %v2298 = vadd.f32 %v2137, %v2297
        %v2299 = vpop.f32.mrb[0].mxu0
        %v2300 = vpop.f32.mrb[0].mxu0
        %v2301 = vadd.f32 %v2140, %v2300
        %v2302 = vpop.f32.mrb[0].mxu0
        %2303 = vmatprep.mubr.bf16.mxu0 0
        %2304 = vmatmul.mubr.bf16.gmra.mrb[0].mxu0 %v1014
        %v2305 = vpop.f32.mrb[0].mxu0
        %v2306 = vadd.f32 %v2145, %v2305
        %v2307 = vpop.f32.mrb[0].mxu0
        %v2308 = vpop.f32.mrb[0].mxu0
        %v2309 = vadd.f32 %v2148, %v2308
        %v2310 = vpop.f32.mrb[0].mxu0
        %2311 = vmatprep.mubr.bf16.mxu0 0
        %2312 = vmatmul.mubr.bf16.gmra.mrb[0].mxu0 %v1022
        %v2313 = vpop.f32.mrb[0].mxu0
        %v2314 = vadd.f32 %v2153, %v2313
        %v2315 = vpop.f32.mrb[0].mxu0
        %v2316 = vpop.f32.mrb[0].mxu0
        %v2317 = vadd.f32 %v2156, %v2316
        %v2318 = vpop.f32.mrb[0].mxu0
        %2319 = vmatprep.mubr.bf16.mxu0 0
        %2320 = vmatmul.mubr.bf16.gmra.mrb[0].mxu0 %v1030
        %v2321 = vpop.f32.mrb[0].mxu0
        %v2322 = vadd.f32 %v2161, %v2321
        %v2323 = vpop.f32.mrb[0].mxu0
        %v2324 = vpop.f32.mrb[0].mxu0
        %v2325 = vadd.f32 %v2164, %v2324
        %v2326 = vpop.f32.mrb[0].mxu0
        %2327 = vmatprep.mubr.bf16.mxu0 0
        %2328 = vmatmul.mubr.bf16.gmra.mrb[0].mxu0 %v1038
        %v2329 = vpop.f32.mrb[0].mxu0
        %v2330 = vadd.f32 %v2169, %v2329
        %v2331 = vpop.f32.mrb[0].mxu0
        %v2332 = vpop.f32.mrb[0].mxu0
        %v2333 = vadd.f32 %v2172, %v2332
        %v2334 = vpop.f32.mrb[0].mxu0
        %2335 = vmatprep.mubr.bf16.mxu0 0
        %2336 = vmatmul.mubr.bf16.gmra.mrb[0].mxu0 %v1046
        %v2337 = vpop.f32.mrb[0].mxu0
        %v2338 = vadd.f32 %v2177, %v2337
        %v2339 = vpop.f32.mrb[0].mxu0
        %v2340 = vpop.f32.mrb[0].mxu0
        %v2341 = vadd.f32 %v2180, %v2340
        %v2342 = vpop.f32.mrb[0].mxu0
        %2343 = vdwg.mxu0
        %2344 = vst [vmem:[%s190] sm:$0xff] %v2218
        %2345 = vst [vmem:[%s190 + $0x8] sm:$0xff] %v2221
        %2346 = vst [vmem:[%s190 + $0x10] sm:$0xff] %v2226
        %2347 = vst [vmem:[%s190 + $0x18] sm:$0xff] %v2229
        %2348 = vst [vmem:[%s190 + $0x20] sm:$0xff] %v2234
        %2349 = vst [vmem:[%s190 + $0x28] sm:$0xff] %v2237
        %2350 = vst [vmem:[%s190 + $0x30] sm:$0xff] %v2242
        %2351 = vst [vmem:[%s190 + $0x38] sm:$0xff] %v2245
        %2352 = vst [vmem:[%s190 + $0x40] sm:$0xff] %v2250
        %2353 = vst [vmem:[%s190 + $0x48] sm:$0xff] %v2253
        %2354 = vst [vmem:[%s190 + $0x50] sm:$0xff] %v2258
        %2355 = vst [vmem:[%s190 + $0x58] sm:$0xff] %v2261
        %2356 = vst [vmem:[%s190 + $0x60] sm:$0xff] %v2266
        %2357 = vst [vmem:[%s190 + $0x68] sm:$0xff] %v2269
        %2358 = vst [vmem:[%s190 + $0x70] sm:$0xff] %v2274
        %2359 = vst [vmem:[%s190 + $0x78] sm:$0xff] %v2277
        %2360 = vst [vmem:[%s190 + $0x80] sm:$0xff] %v2282
        %2361 = vst [vmem:[%s190 + $0x88] sm:$0xff] %v2285
        %2362 = vst [vmem:[%s190 + $0x90] sm:$0xff] %v2290
        %2363 = vst [vmem:[%s190 + $0x98] sm:$0xff] %v2293
        %2364 = vst [vmem:[%s190 + $0xa0] sm:$0xff] %v2298
        %2365 = vst [vmem:[%s190 + $0xa8] sm:$0xff] %v2301
        %2366 = vst [vmem:[%s190 + $0xb0] sm:$0xff] %v2306
        %2367 = vst [vmem:[%s190 + $0xb8] sm:$0xff] %v2309
        %2368 = vst [vmem:[%s190 + $0xc0] sm:$0xff] %v2314
        %2369 = vst [vmem:[%s190 + $0xc8] sm:$0xff] %v2317
        %2370 = vst [vmem:[%s190 + $0xd0] sm:$0xff] %v2322
        %2371 = vst [vmem:[%s190 + $0xd8] sm:$0xff] %v2325
        %2372 = vst [vmem:[%s190 + $0xe0] sm:$0xff] %v2330
        %2373 = vst [vmem:[%s190 + $0xe8] sm:$0xff] %v2333
        %2374 = vst [vmem:[%s190 + $0xf0] sm:$0xff] %v2338
        %2375 = vst [vmem:[%s190 + $0xf8] sm:$0xff] %v2341
        %s2376 = sand.u32 %s93, 1
        %s2377 = scalar_lea.sflag [#allocation4], %s2376
        %s2378 = sand.u32 %s93, 1
        %s2379 = smul.addr %s2378, 256
        %s2380 = scalar_lea.vmem [#allocation5], %s2379
        // Predicated region
        $region33: #{tpu_custom_call.1} parent=27 // pred_check
          %p2381 = pneg %p103
        $region34: #{tpu_custom_call.1} parent=27 // pred_check_branch
          %2383 = sbr.rel (%p2381) target = $region36
        $region35: #{tpu_custom_call.1} parent=27 // pred_region
          %s2384 = smul.u32 16, %s24
          %s2386 = ssub.s32 4096, 4096
          %2387 = vsyncadd %s2377, %s2386
          %s2388 = smul.addr %s2384, 2
          %s2389 = smul.addr %s23, 32
          %s2390 = sadd.s32 %s2388, %s2389
          %s2391 = smul.addr %s2390, 128
          %s2392 = scalar_lea.hbm %s2, %s2391
          %s2393 = sshll.u32 %s2380, 4
          %s2394 = int_to_ptr.vmem [resolvable:$true] %s2393
          %2399 = dma.vmem_to_hbm [thread:$0]  %s2394, 4096, %s2392, %s2377, 128, 128, 8
        $region36: #{tpu_custom_call.1} parent=27 // pred_fallthru
          _
      $region28: #{tpu_custom_call.1} parent=5 // pred_fallthru
        _
      %p2400 = scmp.le.s32.totalorder 2, %s14
      // Predicated region
      $region37: #{tpu_custom_call.1} parent=5 // pred_check
        %p2401 = pneg %p2400
      $region38: #{tpu_custom_call.1} parent=5 // pred_check_branch
        %2403 = sbr.rel (%p2401) target = $region40
      $region39: #{tpu_custom_call.1} parent=5 // pred_region
        %s2404 = ssub.s32 %s14, 2
        // Predicated region
        $region41: #{tpu_custom_call.1} parent=39 // pred_check
          %p2405 = pneg %p109
        $region42: #{tpu_custom_call.1} parent=39 // pred_check_branch
          %2407 = sbr.rel (%p2405) target = $region44
        $region43: #{tpu_custom_call.1} parent=39 // pred_region
          %s2408 = sand.u32 %s94, 1
          %s2409 = scalar_lea.sflag [#allocation4], %s2408
          %s2410 = sand.u32 %s94, 1
          %s2411 = smul.addr %s2410, 256
          %s2412 = scalar_lea.vmem [#allocation5], %s2411
          %2413 = dma.done %s2409, 4096
        $region44: #{tpu_custom_call.1} parent=39 // pred_fallthru
          _
      $region40: #{tpu_custom_call.1} parent=5 // pred_fallthru
        _
    $region6: #{tpu_custom_call.1} parent=1 // loop_footer
      %s18 = sadd.s32 1, %s14
    $region7: #{tpu_custom_call.1} parent=1 // loop_footer_branch
      %13 = sbr.rel target = $region3
    $region8: #{tpu_custom_call.1} parent=1 // loop_exit
      _
    %2414 = vsyncpa [#allocation3], 1
    %s2415 = scalar_lea.sflag [#allocation3], 1
    %2416 = vsyncpa %s2415, 1
    %2417 = vsyncpa [#allocation4], 1
    %s2418 = scalar_lea.sflag [#allocation4], 1
    %2419 = vsyncpa %s2418, 1

</llo_original>
